<compile_context>
chip_gen: v5e
topology: v5e:2x2
jax: 0.10.0
libtpu: 0.0.40
codegen_flags: <defaults>
</compile_context>

<pallas_src>
import functools
import math

import jax
import jax.numpy as jnp
from jax import lax
from jax.experimental import pallas as pl
from jax.experimental.pallas import tpu as pltpu


def _conv2d_cd_kernel(xp_ref, w_ref, o_ref, *, w, tile_h):
    """One batch sample, one row tile of the output.

    xp_ref: (1, Cin, H+2, W+2)    zero-padded input sample (NCHW, f32)
    w_ref : (Cout, 9*Cin)         CD-folded weights, column = (kh*3+kw)*Cin + ci
    o_ref : (1, Cout, tile_h*W)   output row tile, spatially flattened (lane dense)
    """
    cin = xp_ref.shape[1]
    row0 = pl.multiple_of(pl.program_id(1) * tile_h, tile_h)

    # One dynamic slice per grid step: the (tile_h + 2)-row halo band for this tile.
    band = xp_ref[0, :, pl.ds(row0, tile_h + 2), :]          # (Cin, tile_h+2, W+2)

    # im2col slab for this row tile: (9*Cin, tile_h*W); row = (kh*3+kw)*Cin + ci.
    slabs = []
    for kh in range(3):
        rows = band[:, kh:kh + tile_h, :]                     # (Cin, tile_h, W+2)
        for kw in range(3):
            slabs.append(rows[:, :, kw:kw + w].reshape(cin, tile_h * w))
    patches = jnp.concatenate(slabs, axis=0)                  # (9*Cin, tile_h*W)

    # Single MXU matmul: (Cout, 9*Cin) @ (9*Cin, tile_h*W) -> lane-dense store.
    acc = jnp.dot(w_ref[...], patches, preferred_element_type=jnp.float32)
    o_ref[0] = acc.astype(o_ref.dtype)


def _pick_row_tile(h, w, cin, cout, budget_bytes=20 * 1024 * 1024):
    """Largest row tile t dividing H with (t*W) % 128 == 0 that fits a VMEM budget."""
    # The padded sample block is resident (double-buffered) regardless of t.
    base = 2 * 4 * cin * (h + 2) * (w + 2)
    best = None
    for t in range(1, h + 1):
        if h % t or (t * w) % 128:
            continue
        if best is None:
            best = t                                    # smallest legal tile: fallback
        per_tile = 4 * t * w * (9 * cin + 3 * cout)     # patches + acc + 2x out buffers
        if base + per_tile <= budget_bytes:
            best = t                                    # keep growing while it fits
    return best if best is not None else h              # no 128-multiple exists


def conv2d_cd_forward(x, weight, theta=0.7):
    """Pallas forward of Conv2d_cd.  x: (N, Cin, H, W) NCHW; weight: (Cout, Cin, 3, 3)."""
    # TODO(synk): only the module defaults (kernel_size=3, stride=1, padding=1,
    #             dilation=1, groups=1, bias=False) are implemented here.
    n, cin, h, w = x.shape
    cout = weight.shape[0]
    f32 = jnp.float32

    weight = weight.astype(f32)
    # Fold the central-difference term into the 3x3 weights (exact for the defaults).
    if math.fabs(theta) >= 1e-8:
        w_cd = weight.at[:, :, 1, 1].add(-theta * weight.sum(axis=(2, 3)))
    else:
        w_cd = weight
    # (Cout, Cin, 3, 3) -> (Cout, 9*Cin), column = (kh*3+kw)*Cin + ci (matches im2col).
    w_mat = jnp.transpose(w_cd, (0, 2, 3, 1)).reshape(cout, 9 * cin)

    # Zero-pad spatially once (pad=1) so the kernel only does shifted reads.
    xp = jnp.pad(x.astype(f32), ((0, 0), (0, 0), (1, 1), (1, 1)))

    tile_h = _pick_row_tile(h, w, cin, cout)
    grid = (n, h // tile_h)

    kernel = functools.partial(_conv2d_cd_kernel, w=w, tile_h=tile_h)
    out = pl.pallas_call(
        kernel,
        out_shape=jax.ShapeDtypeStruct((n, cout, h * w), f32),
        grid=grid,
        in_specs=[
            pl.BlockSpec((1, cin, h + 2, w + 2), lambda b, t: (b, 0, 0, 0)),
            pl.BlockSpec((cout, 9 * cin), lambda b, t: (0, 0)),
        ],
        out_specs=pl.BlockSpec((1, cout, tile_h * w), lambda b, t: (b, 0, t)),
        compiler_params=pltpu.CompilerParams(
            dimension_semantics=("parallel", "parallel")),
    )(xp, w_mat)

    return out.reshape(n, cout, h, w)


def conv2d_cd_reference(x, weight, theta=0.7):
    """Plain-JAX/XLA replica of the PyTorch forward (for validation)."""
    dn = ("NCHW", "OIHW", "NCHW")
    out_normal = lax.conv_general_dilated(x, weight, (1, 1), ((1, 1), (1, 1)),
                                          dimension_numbers=dn)
    if math.fabs(theta) < 1e-8:
        return out_normal
    kernel_diff = weight.sum(axis=(2, 3))[:, :, None, None]
    out_diff = lax.conv_general_dilated(x, kernel_diff, (1, 1), ((0, 0), (0, 0)),
                                        dimension_numbers=dn)
    return out_normal - theta * out_diff


if __name__ == "__main__":
    N, CIN, COUT, H, W = 2, 4, 8, 16, 16
    THETA = 0.7

    key = jax.random.PRNGKey(0)
    kx, kw = jax.random.split(key)
    x = jax.random.normal(kx, (N, CIN, H, W), jnp.float32)
    weight = jax.random.normal(kw, (COUT, CIN, 3, 3), jnp.float32) * 0.1

    out = conv2d_cd_forward(x, weight, THETA)
    out = jax.block_until_ready(out)

    ref = conv2d_cd_reference(x, weight, THETA)
    assert out.shape == ref.shape == (N, COUT, H, W), (out.shape, ref.shape)
    err = float(jnp.max(jnp.abs(out - ref)))
    scale = float(jnp.max(jnp.abs(ref))) + 1e-6
    assert err <= 2e-2 * max(1.0, scale), f"max abs error {err} (ref scale {scale})"
    print("KERNEL_OK")
</pallas_src>

<mosaic_0001>
module attributes {stable_mosaic.version = 11 : i64} {
  func.func @_conv2d_cd_kernel(%arg0: i32, %arg1: i32, %arg2: memref<1x4x18x18xf32, #tpu.memory_space<vmem>>, %arg3: memref<8x36xf32, #tpu.memory_space<vmem>>, %arg4: memref<1x8x256xf32, #tpu.memory_space<vmem>>) attributes {dimension_semantics = [#tpu.dimension_semantics<parallel>, #tpu.dimension_semantics<parallel>], iteration_bounds = array<i64: 2, 1>, scalar_prefetch = 0 : i64, scratch_operands = 0 : i64, tpu.core_type = #tpu.core_type<tc>, window_params = [{transform_indices = @transform_0, window_bounds = array<i64: 1, 4, 18, 18>}, {pipeline_mode = #tpu.pipeline_mode<synchronous>, transform_indices = @transform_1, window_bounds = array<i64: 8, 36>}, {transform_indices = @transform_2, window_bounds = array<i64: 1, 8, 256>}]} {
    %c16_i32 = arith.constant 16 : i32
    %0 = arith.muli %arg1, %c16_i32 : i32
    %1 = tpu.assume_multiple %0, 16 : i32
    %c0 = arith.constant 0 : index
    %c0_0 = arith.constant 0 : index
    %2 = arith.index_cast %1 : i32 to index
    %c0_1 = arith.constant 0 : index
    %3 = vector.load %arg2[%c0, %c0_0, %2, %c0_1] : memref<1x4x18x18xf32, #tpu.memory_space<vmem>>, vector<1x4x18x18xf32>
    %4 = vector.shape_cast %3 : vector<1x4x18x18xf32> to vector<4x18x18xf32>
    %5 = vector.extract_strided_slice %4 {offsets = [0, 0, 0], sizes = [4, 16, 18], strides = [1, 1, 1]} : vector<4x18x18xf32> to vector<4x16x18xf32>
    %6 = vector.extract_strided_slice %5 {offsets = [0, 0, 0], sizes = [4, 16, 16], strides = [1, 1, 1]} : vector<4x16x18xf32> to vector<4x16x16xf32>
    %7 = vector.shape_cast %6 : vector<4x16x16xf32> to vector<4x256xf32>
    %8 = vector.extract_strided_slice %5 {offsets = [0, 0, 1], sizes = [4, 16, 16], strides = [1, 1, 1]} : vector<4x16x18xf32> to vector<4x16x16xf32>
    %9 = vector.shape_cast %8 : vector<4x16x16xf32> to vector<4x256xf32>
    %10 = vector.extract_strided_slice %5 {offsets = [0, 0, 2], sizes = [4, 16, 16], strides = [1, 1, 1]} : vector<4x16x18xf32> to vector<4x16x16xf32>
    %11 = vector.shape_cast %10 : vector<4x16x16xf32> to vector<4x256xf32>
    %12 = vector.extract_strided_slice %4 {offsets = [0, 1, 0], sizes = [4, 16, 18], strides = [1, 1, 1]} : vector<4x18x18xf32> to vector<4x16x18xf32>
    %13 = vector.extract_strided_slice %12 {offsets = [0, 0, 0], sizes = [4, 16, 16], strides = [1, 1, 1]} : vector<4x16x18xf32> to vector<4x16x16xf32>
    %14 = vector.shape_cast %13 : vector<4x16x16xf32> to vector<4x256xf32>
    %15 = vector.extract_strided_slice %12 {offsets = [0, 0, 1], sizes = [4, 16, 16], strides = [1, 1, 1]} : vector<4x16x18xf32> to vector<4x16x16xf32>
    %16 = vector.shape_cast %15 : vector<4x16x16xf32> to vector<4x256xf32>
    %17 = vector.extract_strided_slice %12 {offsets = [0, 0, 2], sizes = [4, 16, 16], strides = [1, 1, 1]} : vector<4x16x18xf32> to vector<4x16x16xf32>
    %18 = vector.shape_cast %17 : vector<4x16x16xf32> to vector<4x256xf32>
    %19 = vector.extract_strided_slice %4 {offsets = [0, 2, 0], sizes = [4, 16, 18], strides = [1, 1, 1]} : vector<4x18x18xf32> to vector<4x16x18xf32>
    %20 = vector.extract_strided_slice %19 {offsets = [0, 0, 0], sizes = [4, 16, 16], strides = [1, 1, 1]} : vector<4x16x18xf32> to vector<4x16x16xf32>
    %21 = vector.shape_cast %20 : vector<4x16x16xf32> to vector<4x256xf32>
    %22 = vector.extract_strided_slice %19 {offsets = [0, 0, 1], sizes = [4, 16, 16], strides = [1, 1, 1]} : vector<4x16x18xf32> to vector<4x16x16xf32>
    %23 = vector.shape_cast %22 : vector<4x16x16xf32> to vector<4x256xf32>
    %24 = vector.extract_strided_slice %19 {offsets = [0, 0, 2], sizes = [4, 16, 16], strides = [1, 1, 1]} : vector<4x16x18xf32> to vector<4x16x16xf32>
    %25 = vector.shape_cast %24 : vector<4x16x16xf32> to vector<4x256xf32>
    %26 = tpu.concatenate %7, %9, %11, %14, %16, %18, %21, %23, %25 in 0 : vector<4x256xf32>, vector<4x256xf32>, vector<4x256xf32>, vector<4x256xf32>, vector<4x256xf32>, vector<4x256xf32>, vector<4x256xf32>, vector<4x256xf32>, vector<4x256xf32> -> vector<36x256xf32>
    %c0_2 = arith.constant 0 : index
    %c0_3 = arith.constant 0 : index
    %27 = vector.load %arg3[%c0_2, %c0_3] : memref<8x36xf32, #tpu.memory_space<vmem>>, vector<8x36xf32>
    %cst = arith.constant dense<0.000000e+00> : vector<8x256xf32>
    %28 = tpu.matmul %27, %26, %cst {dimension_numbers = #tpu.dot_dimension_numbers<[1], [0], [0], [1], [0, 0, 1, 1], [], []>} : vector<8x36xf32>, vector<36x256xf32>, vector<8x256xf32> -> vector<8x256xf32>
    %c0_4 = arith.constant 0 : index
    %c0_5 = arith.constant 0 : index
    %c0_6 = arith.constant 0 : index
    %29 = vector.load %arg4[%c0_4, %c0_5, %c0_6] : memref<1x8x256xf32, #tpu.memory_space<vmem>>, vector<1x8x256xf32>
    %30 = vector.shape_cast %29 : vector<1x8x256xf32> to vector<8x256xf32>
    %31 = vector.shape_cast %28 : vector<8x256xf32> to vector<1x8x256xf32>
    tpu.vector_store %arg4[%c0_4, %c0_5, %c0_6], %31 {strides = array<i32>} : memref<1x8x256xf32, #tpu.memory_space<vmem>>, vector<1x8x256xf32>,
    return
  }
  func.func @transform_0(%arg0: i32, %arg1: i32) -> (i32, i32, i32, i32) {
    %c0_i32 = arith.constant 0 : i32
    %c0_i32_0 = arith.constant 0 : i32
    %c0_i32_1 = arith.constant 0 : i32
    %c0_i32_2 = arith.constant 0 : i32
    return %arg0, %c0_i32, %c0_i32_0, %c0_i32_1 : i32, i32, i32, i32
  }
  func.func @transform_1(%arg0: i32, %arg1: i32) -> (i32, i32) {
    %c0_i32 = arith.constant 0 : i32
    %c0_i32_0 = arith.constant 0 : i32
    %c0_i32_1 = arith.constant 0 : i32
    return %c0_i32, %c0_i32_0 : i32, i32
  }
  func.func @transform_2(%arg0: i32, %arg1: i32) -> (i32, i32, i32) {
    %c0_i32 = arith.constant 0 : i32
    %c0_i32_0 = arith.constant 0 : i32
    return %arg0, %c0_i32, %arg1 : i32, i32, i32
  }
}

</mosaic_0001>

<llo_original>
// kernel: tpu_custom_call.1
$region0: #{tpu_custom_call.1}
  #allocation0 [shape = 'u32[]', space=smem, size = 0x4, offset = 0x4, fixed_abs, tag = 'smem constant byte address 0x4 - core index']
  #allocation1 [shape = 'u32[72,128]{1,0:T(1,128)}', space=vmem, size = 0x9000, scoped, tag = 'internal scratch']
  %s0 = inlined_call_operand.vmem [shape: f32[2,4,18,18], index: 0, kind: input, shape index: {}]
  %s1 = inlined_call_operand.vmem [shape: f32[8,36], index: 1, kind: input, shape index: {}]
  %s2 = inlined_call_operand.hbm [shape: f32[2,8,256], index: 2, kind: output, shape index: {}]
  %s3 = sld [smem:[#allocation0]]
  $region41: #{tpu_custom_call.1} parent=0
    _
  %s5 = ssub.s32 1, %s3
  %s6 = scalar_select 0, %s5, %s3
  $region1: #{tpu_custom_call.1} parent=0
    #allocation2 [shape = 'u8[16384]{0}', space=vmem, size = 0x4000, scoped, tag = 'output window, operand 0']
    #allocation3 [shape = 's32[2]{0}', space=sflag, size = 0x8, scoped, tag = 'scoped memory for tpu_custom_call.1']
    %7 = vsyncpa [#allocation3], 0
    %s8 = scalar_lea.sflag [#allocation3], 1
    %9 = vsyncpa %s8, 0
    loop: start=0, step=1, limit=4
    $region2: #{tpu_custom_call.1} parent=1 // loop_pre_header
      _
    $region3: #{tpu_custom_call.1} parent=1 // loop_header
      %s11 = sphi 0, %s15
      %p12 = scmp.ge.s32.totalorder %s11, 4
      %s18 = sphi 0, %s30
      %s19 = sphi 0, %s26
      %s20 = sphi 0, %s18
      %s21 = sphi 0, %s19
      %s22 = sphi 0, %s20
      %s23 = sphi 0, %s21
      %s33 = sphi 0, %s35
      %s36 = sphi 0, %s33
      %s37 = sphi 0, %s36
      %s53 = sphi 0, %s37
      %s57 = sphi 0, %s57
      %s59 = sphi 0, %s57
      %s60 = sphi 0, %s59
      %s74 = sphi 0, %s60
      %s82 = sphi 0, %s84
      %s85 = sphi 0, %s82
      %s86 = sphi 0, %s85
      %s102 = sphi 0, %s86
    $region4: #{tpu_custom_call.1} parent=1 // loop_header_branch
      %14 = sbr.rel (%p12) target = $region8
    $region5: #{tpu_custom_call.1} parent=1 // loop_body
      %s16 = ssub.s32 %s11, 1
      %s17 = ssub.s32 %s11, 2
      %s24 = sadd.s32 1, %s19
      %p25 = scmp.ge.s32.totalorder %s24, 1
      %s26 = scalar_select %p25, 0, %s24
      %s27 = sadd.s32 1, %s18
      %s28 = scalar_select %p25, %s27, %s18
      %p29 = scmp.ge.s32.totalorder %s28, 2
      %s30 = scalar_select %p29, 0, %s28
      %s31 = ssub.s32 %s18, %s30
      %p32 = scmp.eq.s32.totalorder %s31, 0
      %s34 = sadd.s32 %s33, 1
      %s35 = scalar_select %p32, %s33, %s34
      %p38 = pneg %p32
      %p39 = scmp.eq.s32.totalorder %s11, 1
      %p40 = por %p38, %p39
      %p41 = scmp.ne.s32.totalorder %s33, %s36
      %p42 = scmp.eq.s32.totalorder %s11, 0
      %p43 = por %p41, %p42
      %p44 = scmp.ne.s32.totalorder %s33, %s36
      %p45 = scmp.eq.s32.totalorder %s16, 1
      %p46 = por %p44, %p45
      %p47 = scmp.ne.s32.totalorder %s36, %s37
      %p48 = scmp.eq.s32.totalorder %s16, 0
      %p49 = por %p47, %p48
      %p50 = scmp.ne.s32.totalorder %s36, %s37
      %p51 = scmp.eq.s32.totalorder %s17, 1
      %p52 = por %p50, %p51
      %p54 = scmp.ne.s32.totalorder %s37, %s53
      %p55 = scmp.eq.s32.totalorder %s17, 0
      %p56 = por %p54, %p55
      %s58 = sadd.s32 %s57, 1
      %p61 = scmp.eq.s32.totalorder %s11, 1
      %p62 = scmp.ne.s32.totalorder %s57, %s59
      %p63 = scmp.eq.s32.totalorder %s11, 0
      %p64 = por %p62, %p63
      %p65 = scmp.ne.s32.totalorder %s57, %s59
      %p66 = scmp.eq.s32.totalorder %s16, 1
      %p67 = por %p65, %p66
      %p68 = scmp.ne.s32.totalorder %s59, %s60
      %p69 = scmp.eq.s32.totalorder %s16, 0
      %p70 = por %p68, %p69
      %p71 = scmp.ne.s32.totalorder %s59, %s60
      %p72 = scmp.eq.s32.totalorder %s17, 1
      %p73 = por %p71, %p72
      %p75 = scmp.ne.s32.totalorder %s60, %s74
      %p76 = scmp.eq.s32.totalorder %s17, 0
      %p77 = por %p75, %p76
      %s78 = ssub.s32 %s18, %s30
      %s79 = ssub.s32 %s19, %s26
      %s80 = sor.u32 %s78, %s79
      %p81 = scmp.eq.s32.totalorder %s80, 0
      %s83 = sadd.s32 %s82, 1
      %s84 = scalar_select %p81, %s82, %s83
      %p87 = pneg %p81
      %p88 = scmp.eq.s32.totalorder %s11, 1
      %p89 = por %p87, %p88
      %p90 = scmp.ne.s32.totalorder %s82, %s85
      %p91 = scmp.eq.s32.totalorder %s11, 0
      %p92 = por %p90, %p91
      %p93 = scmp.ne.s32.totalorder %s82, %s85
      %p94 = scmp.eq.s32.totalorder %s16, 1
      %p95 = por %p93, %p94
      %p96 = scmp.ne.s32.totalorder %s85, %s86
      %p97 = scmp.eq.s32.totalorder %s16, 0
      %p98 = por %p96, %p97
      %p99 = scmp.ne.s32.totalorder %s85, %s86
      %p100 = scmp.eq.s32.totalorder %s17, 1
      %p101 = por %p99, %p100
      %p103 = scmp.ne.s32.totalorder %s86, %s102
      %p104 = scmp.eq.s32.totalorder %s17, 0
      %p105 = por %p103, %p104
      %p106 = scmp.le.s32.totalorder 1, %s11
      %p107 = scmp.lt.s32.totalorder %s11, 3
      %p108 = pnand %p106, %p107
      %p109 = pneg %p108
      // Predicated region
      $region9: #{tpu_custom_call.1} parent=5 // pred_check
        _
      $region10: #{tpu_custom_call.1} parent=5 // pred_check_branch
        %111 = sbr.rel (%p108) target = $region12
      $region11: #{tpu_custom_call.1} parent=5 // pred_region
        %s112 = ssub.s32 %s11, 1
        // Predicated region
        $region13: #{tpu_custom_call.1} parent=11 // pred_check
          %p113 = pneg %p70
        $region14: #{tpu_custom_call.1} parent=11 // pred_check_branch
          %115 = sbr.rel (%p113) target = $region16
        $region15: #{tpu_custom_call.1} parent=11 // pred_region
          _
        $region16: #{tpu_custom_call.1} parent=11 // pred_fallthru
          _
      $region12: #{tpu_custom_call.1} parent=5 // pred_fallthru
        _
      %p116 = scmp.lt.s32.totalorder %s11, 2
      // Predicated region
      $region17: #{tpu_custom_call.1} parent=5 // pred_check
        %p117 = pneg %p116
      $region18: #{tpu_custom_call.1} parent=5 // pred_check_branch
        %119 = sbr.rel (%p117) target = $region20
      $region19: #{tpu_custom_call.1} parent=5 // pred_region
        // Predicated region
        $region21: #{tpu_custom_call.1} parent=19 // pred_check
          %p120 = pneg %p43
        $region22: #{tpu_custom_call.1} parent=19 // pred_check_branch
          %122 = sbr.rel (%p120) target = $region24
        $region23: #{tpu_custom_call.1} parent=19 // pred_region
          %p123 = scmp.lt.s32.totalorder %s18, 1
          %s124 = scalar_select %p123, %s18, 1
          %s125 = smul.addr %s124, 12
          %s126 = smul.addr %s125, 8
          %s127 = scalar_lea.vmem %s0, %s126
        $region24: #{tpu_custom_call.1} parent=19 // pred_fallthru
          _
      $region20: #{tpu_custom_call.1} parent=5 // pred_fallthru
        _
      %p128 = scmp.le.s32.totalorder 1, %s11
      %p129 = scmp.lt.s32.totalorder %s11, 3
      %p130 = pnand %p128, %p129
      %p131 = pneg %p130
      // Predicated region
      $region25: #{tpu_custom_call.1} parent=5 // pred_check
        _
      $region26: #{tpu_custom_call.1} parent=5 // pred_check_branch
        %133 = sbr.rel (%p130) target = $region28
      $region27: #{tpu_custom_call.1} parent=5 // pred_region
        %s134 = ssub.s32 %s11, 1
        %p135 = scmp.lt.s32.totalorder %s20, 1
        %s136 = scalar_select %p135, %s20, 1
        %s137 = smul.addr %s136, 12
        %s138 = smul.addr %s137, 8
        %s139 = scalar_lea.vmem %s0, %s138
        %p140 = pneg %p49
        %p141 = pneg %p46
        %p142 = pneg %p70
        %p143 = pneg %p67
        %p144 = pneg %p98
        %p145 = pneg %p95
        %s146 = sand.u32 %s85, 1
        %s147 = scalar_lea.sflag [#allocation3], %s146
        %s148 = sand.u32 %s85, 1
        %s149 = smul.addr %s148, 16
        %s150 = scalar_lea.vmem [#allocation2], %s149
        %p151 = scmp.lt.s32.totalorder %s20, 1
        %s152 = scalar_select %p151, %s20, 1
        %s153 = smul.addr %s152, 12
        %s154 = smul.addr %s153, 8
        %s155 = scalar_lea.vmem %s0, %s154
        %s156 = smul.u32 2, %s21
        %s157 = smul.u32 %s21, 16
        %s158 = scalar_lea.vmem %s155, %s157
        %v159 = vld [vmem:[%s158] sm:$0xff]
        %v160 = vld [vmem:[%s158 + $0x8] sm:$0xff]
        %v161 = vld [vmem:[%s158 + $0x10] sm:$0x3]
        %v162 = vld [vmem:[%s158 + $0x18] sm:$0xff]
        %v163 = vld [vmem:[%s158 + $0x20] sm:$0xff]
        %v164 = vld [vmem:[%s158 + $0x28] sm:$0x3]
        %v165 = vld [vmem:[%s158 + $0x30] sm:$0xff]
        %v166 = vld [vmem:[%s158 + $0x38] sm:$0xff]
        %v167 = vld [vmem:[%s158 + $0x40] sm:$0x3]
        %v168 = vld [vmem:[%s158 + $0x48] sm:$0xff]
        %v169 = vld [vmem:[%s158 + $0x50] sm:$0xff]
        %v170 = vld [vmem:[%s158 + $0x58] sm:$0x3]
        %v171 = vrot.slane %v165, 4
        %vm172 = vcmask 1047556
        %v173 = vsel %vm172, %v171, %v159
        %v174 = vrot.slane %v159, 4
        %v175 = vsel %vm172, %v165, %v174
        %v177 = vunpack.c.l.s4 1983009808
        %v178 = vunpack.c.0.s8 %v177
        %v179 = vperm.slane %v173, %v178
        %v181 = vunpack.c.l.s4 1983009808
        %v182 = vunpack.c.0.s8 %v181
        %v183 = vperm.slane %v175, %v182
        %v184 = vrot.slane %v168, 4
        %v185 = vsel %vm172, %v184, %v162
        %v186 = vrot.slane %v162, 4
        %v187 = vsel %vm172, %v168, %v186
        %v189 = vunpack.c.l.s4 1983009808
        %v190 = vunpack.c.0.s8 %v189
        %v191 = vperm.slane %v185, %v190
        %v193 = vunpack.c.l.s4 1983009808
        %v194 = vunpack.c.0.s8 %v193
        %v195 = vperm.slane %v187, %v194
        %v196 = vrot.slane %v191, 4
        %v197 = vsel %vm172, %v196, %v179
        %v198 = vrot.slane %v179, 4
        %v199 = vsel %vm172, %v191, %v198
        %v201 = vunpack.c.l.s4 1934713408
        %v202 = vunpack.c.0.s8 %v201
        %v203 = vperm.slane %v197, %v202
        %v205 = vunpack.c.l.s4 1934713408
        %v206 = vunpack.c.0.s8 %v205
        %v207 = vperm.slane %v199, %v206
        %v208 = vrot.slane %v195, 4
        %v209 = vsel %vm172, %v208, %v183
        %v210 = vrot.slane %v183, 4
        %v211 = vsel %vm172, %v195, %v210
        %v213 = vunpack.c.l.s4 1934713408
        %v214 = vunpack.c.0.s8 %v213
        %v215 = vperm.slane %v209, %v214
        %v217 = vunpack.c.l.s4 1934713408
        %v218 = vunpack.c.0.s8 %v217
        %v219 = vperm.slane %v211, %v218
        %v220 = vrot.slane %v203, 4
        %v221 = vsel %vm172, 0.0, %v220
        %v222 = vrot.slane %v207, 4
        %v223 = vsel %vm172, 0.0, %v222
        %v224 = vrot.slane %v215, 4
        %v225 = vsel %vm172, 0.0, %v224
        %v226 = vrot.slane %v219, 4
        %v227 = vsel %vm172, 0.0, %v226
        %v228 = vrot.slane %v166, 4
        %v229 = vsel %vm172, %v228, %v160
        %v230 = vrot.slane %v160, 4
        %v231 = vsel %vm172, %v166, %v230
        %v233 = vunpack.c.l.s4 1983009808
        %v234 = vunpack.c.0.s8 %v233
        %v235 = vperm.slane %v229, %v234
        %v237 = vunpack.c.l.s4 1983009808
        %v238 = vunpack.c.0.s8 %v237
        %v239 = vperm.slane %v231, %v238
        %v240 = vrot.slane %v169, 4
        %v241 = vsel %vm172, %v240, %v163
        %v242 = vrot.slane %v163, 4
        %v243 = vsel %vm172, %v169, %v242
        %v245 = vunpack.c.l.s4 1983009808
        %v246 = vunpack.c.0.s8 %v245
        %v247 = vperm.slane %v241, %v246
        %v249 = vunpack.c.l.s4 1983009808
        %v250 = vunpack.c.0.s8 %v249
        %v251 = vperm.slane %v243, %v250
        %v252 = vrot.slane %v247, 4
        %v253 = vsel %vm172, %v252, %v235
        %v254 = vrot.slane %v235, 4
        %v255 = vsel %vm172, %v247, %v254
        %v257 = vunpack.c.l.s4 1934713408
        %v258 = vunpack.c.0.s8 %v257
        %v259 = vperm.slane %v253, %v258
        %v261 = vunpack.c.l.s4 1934713408
        %v262 = vunpack.c.0.s8 %v261
        %v263 = vperm.slane %v255, %v262
        %v264 = vrot.slane %v251, 4
        %v265 = vsel %vm172, %v264, %v239
        %v266 = vrot.slane %v239, 4
        %v267 = vsel %vm172, %v251, %v266
        %v269 = vunpack.c.l.s4 1934713408
        %v270 = vunpack.c.0.s8 %v269
        %v271 = vperm.slane %v265, %v270
        %v273 = vunpack.c.l.s4 1934713408
        %v274 = vunpack.c.0.s8 %v273
        %v275 = vperm.slane %v267, %v274
        %v276 = vrot.slane %v259, 4
        %v277 = vsel %vm172, 0.0, %v276
        %v278 = vrot.slane %v263, 4
        %v279 = vsel %vm172, 0.0, %v278
        %v280 = vrot.slane %v271, 4
        %v281 = vsel %vm172, 0.0, %v280
        %v282 = vrot.slane %v275, 4
        %v283 = vsel %vm172, 0.0, %v282
        %285 = vrot.lane.b32.xlu0 %v221, 16
        %v286 = vpop.permute.xlu0 %285
        %289 = vrot.lane.b32.xlu0 %v207, 32
        %v290 = vpop.permute.xlu0 %289
        %293 = vrot.lane.b32.xlu0 %v223, 48
        %v294 = vpop.permute.xlu0 %293
        %297 = vrot.lane.b32.xlu0 %v215, 64
        %v298 = vpop.permute.xlu0 %297
        %301 = vrot.lane.b32.xlu0 %v225, 80
        %v302 = vpop.permute.xlu0 %301
        %305 = vrot.lane.b32.xlu0 %v219, 96
        %v306 = vpop.permute.xlu0 %305
        %309 = vrot.lane.b32.xlu0 %v227, 112
        %v310 = vpop.permute.xlu0 %309
        %313 = vrot.lane.b32.xlu0 %v277, 16
        %v314 = vpop.permute.xlu0 %313
        %317 = vrot.lane.b32.xlu0 %v263, 32
        %v318 = vpop.permute.xlu0 %317
        %321 = vrot.lane.b32.xlu0 %v279, 48
        %v322 = vpop.permute.xlu0 %321
        %325 = vrot.lane.b32.xlu0 %v271, 64
        %v326 = vpop.permute.xlu0 %325
        %329 = vrot.lane.b32.xlu0 %v281, 80
        %v330 = vpop.permute.xlu0 %329
        %333 = vrot.lane.b32.xlu0 %v275, 96
        %v334 = vpop.permute.xlu0 %333
        %337 = vrot.lane.b32.xlu0 %v283, 112
        %v338 = vpop.permute.xlu0 %337
        %vm340 = vcmask 130048
        %v341 = vsel %vm340, %v203, %v286
        %vm342 = vcmask 261120
        %v343 = vsel %vm342, %v341, %v290
        %vm344 = vcmask 392192
        %v345 = vsel %vm344, %v343, %v294
        %vm346 = vcmask 523264
        %v347 = vsel %vm346, %v345, %v298
        %vm348 = vcmask 654336
        %v349 = vsel %vm348, %v347, %v302
        %vm350 = vcmask 785408
        %v351 = vsel %vm350, %v349, %v306
        %vm352 = vcmask 916480
        %v353 = vsel %vm352, %v351, %v310
        %v354 = vsel %vm340, %v259, %v314
        %v355 = vsel %vm342, %v354, %v318
        %v356 = vsel %vm344, %v355, %v322
        %v357 = vsel %vm346, %v356, %v326
        %v358 = vsel %vm348, %v357, %v330
        %v359 = vsel %vm350, %v358, %v334
        %v360 = vsel %vm352, %v359, %v338
        %369 = vrot.lane.b32.xlu0 %v159, 127
        %v370 = vpop.permute.xlu0 %369
        %371 = vrot.lane.b32.xlu0 %v160, 127
        %v372 = vpop.permute.xlu0 %371
        %373 = vrot.lane.b32.xlu0 %v162, 127
        %v374 = vpop.permute.xlu0 %373
        %375 = vrot.lane.b32.xlu0 %v163, 127
        %v376 = vpop.permute.xlu0 %375
        %377 = vrot.lane.b32.xlu0 %v165, 127
        %v378 = vpop.permute.xlu0 %377
        %379 = vrot.lane.b32.xlu0 %v166, 127
        %v380 = vpop.permute.xlu0 %379
        %381 = vrot.lane.b32.xlu0 %v168, 127
        %v382 = vpop.permute.xlu0 %381
        %383 = vrot.lane.b32.xlu0 %v169, 127
        %v384 = vpop.permute.xlu0 %383
        %v393 = vrot.slane %v378, 4
        %v394 = vsel %vm172, %v393, %v370
        %v395 = vrot.slane %v370, 4
        %v396 = vsel %vm172, %v378, %v395
        %v398 = vunpack.c.l.s4 1983009808
        %v399 = vunpack.c.0.s8 %v398
        %v400 = vperm.slane %v394, %v399
        %v402 = vunpack.c.l.s4 1983009808
        %v403 = vunpack.c.0.s8 %v402
        %v404 = vperm.slane %v396, %v403
        %v405 = vrot.slane %v382, 4
        %v406 = vsel %vm172, %v405, %v374
        %v407 = vrot.slane %v374, 4
        %v408 = vsel %vm172, %v382, %v407
        %v410 = vunpack.c.l.s4 1983009808
        %v411 = vunpack.c.0.s8 %v410
        %v412 = vperm.slane %v406, %v411
        %v414 = vunpack.c.l.s4 1983009808
        %v415 = vunpack.c.0.s8 %v414
        %v416 = vperm.slane %v408, %v415
        %v417 = vrot.slane %v412, 4
        %v418 = vsel %vm172, %v417, %v400
        %v419 = vrot.slane %v400, 4
        %v420 = vsel %vm172, %v412, %v419
        %v422 = vunpack.c.l.s4 1934713408
        %v423 = vunpack.c.0.s8 %v422
        %v424 = vperm.slane %v418, %v423
        %v426 = vunpack.c.l.s4 1934713408
        %v427 = vunpack.c.0.s8 %v426
        %v428 = vperm.slane %v420, %v427
        %v429 = vrot.slane %v416, 4
        %v430 = vsel %vm172, %v429, %v404
        %v431 = vrot.slane %v404, 4
        %v432 = vsel %vm172, %v416, %v431
        %v434 = vunpack.c.l.s4 1934713408
        %v435 = vunpack.c.0.s8 %v434
        %v436 = vperm.slane %v430, %v435
        %v438 = vunpack.c.l.s4 1934713408
        %v439 = vunpack.c.0.s8 %v438
        %v440 = vperm.slane %v432, %v439
        %v441 = vrot.slane %v424, 4
        %v442 = vsel %vm172, 0.0, %v441
        %v443 = vrot.slane %v428, 4
        %v444 = vsel %vm172, 0.0, %v443
        %v445 = vrot.slane %v436, 4
        %v446 = vsel %vm172, 0.0, %v445
        %v447 = vrot.slane %v440, 4
        %v448 = vsel %vm172, 0.0, %v447
        %v449 = vrot.slane %v380, 4
        %v450 = vsel %vm172, %v449, %v372
        %v451 = vrot.slane %v372, 4
        %v452 = vsel %vm172, %v380, %v451
        %v454 = vunpack.c.l.s4 1983009808
        %v455 = vunpack.c.0.s8 %v454
        %v456 = vperm.slane %v450, %v455
        %v458 = vunpack.c.l.s4 1983009808
        %v459 = vunpack.c.0.s8 %v458
        %v460 = vperm.slane %v452, %v459
        %v461 = vrot.slane %v384, 4
        %v462 = vsel %vm172, %v461, %v376
        %v463 = vrot.slane %v376, 4
        %v464 = vsel %vm172, %v384, %v463
        %v466 = vunpack.c.l.s4 1983009808
        %v467 = vunpack.c.0.s8 %v466
        %v468 = vperm.slane %v462, %v467
        %v470 = vunpack.c.l.s4 1983009808
        %v471 = vunpack.c.0.s8 %v470
        %v472 = vperm.slane %v464, %v471
        %v473 = vrot.slane %v468, 4
        %v474 = vsel %vm172, %v473, %v456
        %v475 = vrot.slane %v456, 4
        %v476 = vsel %vm172, %v468, %v475
        %v478 = vunpack.c.l.s4 1934713408
        %v479 = vunpack.c.0.s8 %v478
        %v480 = vperm.slane %v474, %v479
        %v482 = vunpack.c.l.s4 1934713408
        %v483 = vunpack.c.0.s8 %v482
        %v484 = vperm.slane %v476, %v483
        %v485 = vrot.slane %v472, 4
        %v486 = vsel %vm172, %v485, %v460
        %v487 = vrot.slane %v460, 4
        %v488 = vsel %vm172, %v472, %v487
        %v490 = vunpack.c.l.s4 1934713408
        %v491 = vunpack.c.0.s8 %v490
        %v492 = vperm.slane %v486, %v491
        %v494 = vunpack.c.l.s4 1934713408
        %v495 = vunpack.c.0.s8 %v494
        %v496 = vperm.slane %v488, %v495
        %v497 = vrot.slane %v480, 4
        %v498 = vsel %vm172, 0.0, %v497
        %v499 = vrot.slane %v484, 4
        %v500 = vsel %vm172, 0.0, %v499
        %v501 = vrot.slane %v492, 4
        %v502 = vsel %vm172, 0.0, %v501
        %v503 = vrot.slane %v496, 4
        %v504 = vsel %vm172, 0.0, %v503
        %506 = vrot.lane.b32.xlu0 %v442, 16
        %v507 = vpop.permute.xlu0 %506
        %510 = vrot.lane.b32.xlu0 %v428, 32
        %v511 = vpop.permute.xlu0 %510
        %514 = vrot.lane.b32.xlu0 %v444, 48
        %v515 = vpop.permute.xlu0 %514
        %518 = vrot.lane.b32.xlu0 %v436, 64
        %v519 = vpop.permute.xlu0 %518
        %522 = vrot.lane.b32.xlu0 %v446, 80
        %v523 = vpop.permute.xlu0 %522
        %526 = vrot.lane.b32.xlu0 %v440, 96
        %v527 = vpop.permute.xlu0 %526
        %530 = vrot.lane.b32.xlu0 %v448, 112
        %v531 = vpop.permute.xlu0 %530
        %534 = vrot.lane.b32.xlu0 %v498, 16
        %v535 = vpop.permute.xlu0 %534
        %538 = vrot.lane.b32.xlu0 %v484, 32
        %v539 = vpop.permute.xlu0 %538
        %542 = vrot.lane.b32.xlu0 %v500, 48
        %v543 = vpop.permute.xlu0 %542
        %546 = vrot.lane.b32.xlu0 %v492, 64
        %v547 = vpop.permute.xlu0 %546
        %550 = vrot.lane.b32.xlu0 %v502, 80
        %v551 = vpop.permute.xlu0 %550
        %554 = vrot.lane.b32.xlu0 %v496, 96
        %v555 = vpop.permute.xlu0 %554
        %558 = vrot.lane.b32.xlu0 %v504, 112
        %v559 = vpop.permute.xlu0 %558
        %v561 = vsel %vm340, %v424, %v507
        %v562 = vsel %vm342, %v561, %v511
        %v563 = vsel %vm344, %v562, %v515
        %v564 = vsel %vm346, %v563, %v519
        %v565 = vsel %vm348, %v564, %v523
        %v566 = vsel %vm350, %v565, %v527
        %v567 = vsel %vm352, %v566, %v531
        %v568 = vsel %vm340, %v480, %v535
        %v569 = vsel %vm342, %v568, %v539
        %v570 = vsel %vm344, %v569, %v543
        %v571 = vsel %vm346, %v570, %v547
        %v572 = vsel %vm348, %v571, %v551
        %v573 = vsel %vm350, %v572, %v555
        %v574 = vsel %vm352, %v573, %v559
        %575 = vrot.lane.b32.xlu0 %v159, 126
        %v576 = vpop.permute.xlu0 %575
        %577 = vrot.lane.b32.xlu0 %v160, 126
        %v578 = vpop.permute.xlu0 %577
        %579 = vrot.lane.b32.xlu0 %v162, 126
        %v580 = vpop.permute.xlu0 %579
        %581 = vrot.lane.b32.xlu0 %v163, 126
        %v582 = vpop.permute.xlu0 %581
        %583 = vrot.lane.b32.xlu0 %v165, 126
        %v584 = vpop.permute.xlu0 %583
        %585 = vrot.lane.b32.xlu0 %v166, 126
        %v586 = vpop.permute.xlu0 %585
        %587 = vrot.lane.b32.xlu0 %v168, 126
        %v588 = vpop.permute.xlu0 %587
        %589 = vrot.lane.b32.xlu0 %v169, 126
        %v590 = vpop.permute.xlu0 %589
        %v599 = vrot.slane %v584, 4
        %v600 = vsel %vm172, %v599, %v576
        %v601 = vrot.slane %v576, 4
        %v602 = vsel %vm172, %v584, %v601
        %v604 = vunpack.c.l.s4 1983009808
        %v605 = vunpack.c.0.s8 %v604
        %v606 = vperm.slane %v600, %v605
        %v608 = vunpack.c.l.s4 1983009808
        %v609 = vunpack.c.0.s8 %v608
        %v610 = vperm.slane %v602, %v609
        %v611 = vrot.slane %v588, 4
        %v612 = vsel %vm172, %v611, %v580
        %v613 = vrot.slane %v580, 4
        %v614 = vsel %vm172, %v588, %v613
        %v616 = vunpack.c.l.s4 1983009808
        %v617 = vunpack.c.0.s8 %v616
        %v618 = vperm.slane %v612, %v617
        %v620 = vunpack.c.l.s4 1983009808
        %v621 = vunpack.c.0.s8 %v620
        %v622 = vperm.slane %v614, %v621
        %v623 = vrot.slane %v618, 4
        %v624 = vsel %vm172, %v623, %v606
        %v625 = vrot.slane %v606, 4
        %v626 = vsel %vm172, %v618, %v625
        %v628 = vunpack.c.l.s4 1934713408
        %v629 = vunpack.c.0.s8 %v628
        %v630 = vperm.slane %v624, %v629
        %v632 = vunpack.c.l.s4 1934713408
        %v633 = vunpack.c.0.s8 %v632
        %v634 = vperm.slane %v626, %v633
        %v635 = vrot.slane %v622, 4
        %v636 = vsel %vm172, %v635, %v610
        %v637 = vrot.slane %v610, 4
        %v638 = vsel %vm172, %v622, %v637
        %v640 = vunpack.c.l.s4 1934713408
        %v641 = vunpack.c.0.s8 %v640
        %v642 = vperm.slane %v636, %v641
        %v644 = vunpack.c.l.s4 1934713408
        %v645 = vunpack.c.0.s8 %v644
        %v646 = vperm.slane %v638, %v645
        %v647 = vrot.slane %v630, 4
        %v648 = vsel %vm172, 0.0, %v647
        %v649 = vrot.slane %v634, 4
        %v650 = vsel %vm172, 0.0, %v649
        %v651 = vrot.slane %v642, 4
        %v652 = vsel %vm172, 0.0, %v651
        %v653 = vrot.slane %v646, 4
        %v654 = vsel %vm172, 0.0, %v653
        %v655 = vrot.slane %v586, 4
        %v656 = vsel %vm172, %v655, %v578
        %v657 = vrot.slane %v578, 4
        %v658 = vsel %vm172, %v586, %v657
        %v660 = vunpack.c.l.s4 1983009808
        %v661 = vunpack.c.0.s8 %v660
        %v662 = vperm.slane %v656, %v661
        %v664 = vunpack.c.l.s4 1983009808
        %v665 = vunpack.c.0.s8 %v664
        %v666 = vperm.slane %v658, %v665
        %v667 = vrot.slane %v590, 4
        %v668 = vsel %vm172, %v667, %v582
        %v669 = vrot.slane %v582, 4
        %v670 = vsel %vm172, %v590, %v669
        %v672 = vunpack.c.l.s4 1983009808
        %v673 = vunpack.c.0.s8 %v672
        %v674 = vperm.slane %v668, %v673
        %v676 = vunpack.c.l.s4 1983009808
        %v677 = vunpack.c.0.s8 %v676
        %v678 = vperm.slane %v670, %v677
        %v679 = vrot.slane %v674, 4
        %v680 = vsel %vm172, %v679, %v662
        %v681 = vrot.slane %v662, 4
        %v682 = vsel %vm172, %v674, %v681
        %v684 = vunpack.c.l.s4 1934713408
        %v685 = vunpack.c.0.s8 %v684
        %v686 = vperm.slane %v680, %v685
        %v688 = vunpack.c.l.s4 1934713408
        %v689 = vunpack.c.0.s8 %v688
        %v690 = vperm.slane %v682, %v689
        %v691 = vrot.slane %v678, 4
        %v692 = vsel %vm172, %v691, %v666
        %v693 = vrot.slane %v666, 4
        %v694 = vsel %vm172, %v678, %v693
        %v696 = vunpack.c.l.s4 1934713408
        %v697 = vunpack.c.0.s8 %v696
        %v698 = vperm.slane %v692, %v697
        %v700 = vunpack.c.l.s4 1934713408
        %v701 = vunpack.c.0.s8 %v700
        %v702 = vperm.slane %v694, %v701
        %v703 = vrot.slane %v686, 4
        %v704 = vsel %vm172, 0.0, %v703
        %v705 = vrot.slane %v690, 4
        %v706 = vsel %vm172, 0.0, %v705
        %v707 = vrot.slane %v698, 4
        %v708 = vsel %vm172, 0.0, %v707
        %v709 = vrot.slane %v702, 4
        %v710 = vsel %vm172, 0.0, %v709
        %712 = vrot.lane.b32.xlu0 %v648, 16
        %v713 = vpop.permute.xlu0 %712
        %716 = vrot.lane.b32.xlu0 %v634, 32
        %v717 = vpop.permute.xlu0 %716
        %720 = vrot.lane.b32.xlu0 %v650, 48
        %v721 = vpop.permute.xlu0 %720
        %724 = vrot.lane.b32.xlu0 %v642, 64
        %v725 = vpop.permute.xlu0 %724
        %728 = vrot.lane.b32.xlu0 %v652, 80
        %v729 = vpop.permute.xlu0 %728
        %732 = vrot.lane.b32.xlu0 %v646, 96
        %v733 = vpop.permute.xlu0 %732
        %736 = vrot.lane.b32.xlu0 %v654, 112
        %v737 = vpop.permute.xlu0 %736
        %740 = vrot.lane.b32.xlu0 %v704, 16
        %v741 = vpop.permute.xlu0 %740
        %744 = vrot.lane.b32.xlu0 %v690, 32
        %v745 = vpop.permute.xlu0 %744
        %748 = vrot.lane.b32.xlu0 %v706, 48
        %v749 = vpop.permute.xlu0 %748
        %752 = vrot.lane.b32.xlu0 %v698, 64
        %v753 = vpop.permute.xlu0 %752
        %756 = vrot.lane.b32.xlu0 %v708, 80
        %v757 = vpop.permute.xlu0 %756
        %760 = vrot.lane.b32.xlu0 %v702, 96
        %v761 = vpop.permute.xlu0 %760
        %764 = vrot.lane.b32.xlu0 %v710, 112
        %v765 = vpop.permute.xlu0 %764
        %v767 = vsel %vm340, %v630, %v713
        %v768 = vsel %vm342, %v767, %v717
        %v769 = vsel %vm344, %v768, %v721
        %v770 = vsel %vm346, %v769, %v725
        %v771 = vsel %vm348, %v770, %v729
        %v772 = vsel %vm350, %v771, %v733
        %v773 = vsel %vm352, %v772, %v737
        %v774 = vsel %vm340, %v686, %v741
        %v775 = vsel %vm342, %v774, %v745
        %v776 = vsel %vm344, %v775, %v749
        %v777 = vsel %vm346, %v776, %v753
        %v778 = vsel %vm348, %v777, %v757
        %v779 = vsel %vm350, %v778, %v761
        %v780 = vsel %vm352, %v779, %v765
        %vm785 = vcmask 1046528
        %v786 = vrot.slane %v159, 1
        %v787 = vrot.slane %v160, 1
        %v788 = vsel %vm785, %v786, %v787
        %v789 = vrot.slane %v161, 1
        %v790 = vsel %vm785, %v787, %v789
        %v791 = vrot.slane %v162, 1
        %v792 = vrot.slane %v163, 1
        %v793 = vsel %vm785, %v791, %v792
        %v794 = vrot.slane %v164, 1
        %v795 = vsel %vm785, %v792, %v794
        %v796 = vrot.slane %v165, 1
        %v797 = vrot.slane %v166, 1
        %v798 = vsel %vm785, %v796, %v797
        %v799 = vrot.slane %v167, 1
        %v800 = vsel %vm785, %v797, %v799
        %v801 = vrot.slane %v168, 1
        %v802 = vrot.slane %v169, 1
        %v803 = vsel %vm785, %v801, %v802
        %v804 = vrot.slane %v170, 1
        %v805 = vsel %vm785, %v802, %v804
        %v814 = vrot.slane %v798, 4
        %v815 = vsel %vm172, %v814, %v788
        %v816 = vrot.slane %v788, 4
        %v817 = vsel %vm172, %v798, %v816
        %v819 = vunpack.c.l.s4 1983009808
        %v820 = vunpack.c.0.s8 %v819
        %v821 = vperm.slane %v815, %v820
        %v823 = vunpack.c.l.s4 1983009808
        %v824 = vunpack.c.0.s8 %v823
        %v825 = vperm.slane %v817, %v824
        %v826 = vrot.slane %v803, 4
        %v827 = vsel %vm172, %v826, %v793
        %v828 = vrot.slane %v793, 4
        %v829 = vsel %vm172, %v803, %v828
        %v831 = vunpack.c.l.s4 1983009808
        %v832 = vunpack.c.0.s8 %v831
        %v833 = vperm.slane %v827, %v832
        %v835 = vunpack.c.l.s4 1983009808
        %v836 = vunpack.c.0.s8 %v835
        %v837 = vperm.slane %v829, %v836
        %v838 = vrot.slane %v833, 4
        %v839 = vsel %vm172, %v838, %v821
        %v840 = vrot.slane %v821, 4
        %v841 = vsel %vm172, %v833, %v840
        %v843 = vunpack.c.l.s4 1934713408
        %v844 = vunpack.c.0.s8 %v843
        %v845 = vperm.slane %v839, %v844
        %v847 = vunpack.c.l.s4 1934713408
        %v848 = vunpack.c.0.s8 %v847
        %v849 = vperm.slane %v841, %v848
        %v850 = vrot.slane %v837, 4
        %v851 = vsel %vm172, %v850, %v825
        %v852 = vrot.slane %v825, 4
        %v853 = vsel %vm172, %v837, %v852
        %v855 = vunpack.c.l.s4 1934713408
        %v856 = vunpack.c.0.s8 %v855
        %v857 = vperm.slane %v851, %v856
        %v859 = vunpack.c.l.s4 1934713408
        %v860 = vunpack.c.0.s8 %v859
        %v861 = vperm.slane %v853, %v860
        %v862 = vrot.slane %v845, 4
        %v863 = vsel %vm172, 0.0, %v862
        %v864 = vrot.slane %v849, 4
        %v865 = vsel %vm172, 0.0, %v864
        %v866 = vrot.slane %v857, 4
        %v867 = vsel %vm172, 0.0, %v866
        %v868 = vrot.slane %v861, 4
        %v869 = vsel %vm172, 0.0, %v868
        %v870 = vrot.slane %v800, 4
        %v871 = vsel %vm172, %v870, %v790
        %v872 = vrot.slane %v790, 4
        %v873 = vsel %vm172, %v800, %v872
        %v875 = vunpack.c.l.s4 1983009808
        %v876 = vunpack.c.0.s8 %v875
        %v877 = vperm.slane %v871, %v876
        %v879 = vunpack.c.l.s4 1983009808
        %v880 = vunpack.c.0.s8 %v879
        %v881 = vperm.slane %v873, %v880
        %v882 = vrot.slane %v805, 4
        %v883 = vsel %vm172, %v882, %v795
        %v884 = vrot.slane %v795, 4
        %v885 = vsel %vm172, %v805, %v884
        %v887 = vunpack.c.l.s4 1983009808
        %v888 = vunpack.c.0.s8 %v887
        %v889 = vperm.slane %v883, %v888
        %v891 = vunpack.c.l.s4 1983009808
        %v892 = vunpack.c.0.s8 %v891
        %v893 = vperm.slane %v885, %v892
        %v894 = vrot.slane %v889, 4
        %v895 = vsel %vm172, %v894, %v877
        %v896 = vrot.slane %v877, 4
        %v897 = vsel %vm172, %v889, %v896
        %v899 = vunpack.c.l.s4 1934713408
        %v900 = vunpack.c.0.s8 %v899
        %v901 = vperm.slane %v895, %v900
        %v903 = vunpack.c.l.s4 1934713408
        %v904 = vunpack.c.0.s8 %v903
        %v905 = vperm.slane %v897, %v904
        %v906 = vrot.slane %v893, 4
        %v907 = vsel %vm172, %v906, %v881
        %v908 = vrot.slane %v881, 4
        %v909 = vsel %vm172, %v893, %v908
        %v911 = vunpack.c.l.s4 1934713408
        %v912 = vunpack.c.0.s8 %v911
        %v913 = vperm.slane %v907, %v912
        %v915 = vunpack.c.l.s4 1934713408
        %v916 = vunpack.c.0.s8 %v915
        %v917 = vperm.slane %v909, %v916
        %v918 = vrot.slane %v901, 4
        %v919 = vsel %vm172, 0.0, %v918
        %v920 = vrot.slane %v905, 4
        %v921 = vsel %vm172, 0.0, %v920
        %v922 = vrot.slane %v913, 4
        %v923 = vsel %vm172, 0.0, %v922
        %v924 = vrot.slane %v917, 4
        %v925 = vsel %vm172, 0.0, %v924
        %927 = vrot.lane.b32.xlu0 %v863, 16
        %v928 = vpop.permute.xlu0 %927
        %931 = vrot.lane.b32.xlu0 %v849, 32
        %v932 = vpop.permute.xlu0 %931
        %935 = vrot.lane.b32.xlu0 %v865, 48
        %v936 = vpop.permute.xlu0 %935
        %939 = vrot.lane.b32.xlu0 %v857, 64
        %v940 = vpop.permute.xlu0 %939
        %943 = vrot.lane.b32.xlu0 %v867, 80
        %v944 = vpop.permute.xlu0 %943
        %947 = vrot.lane.b32.xlu0 %v861, 96
        %v948 = vpop.permute.xlu0 %947
        %951 = vrot.lane.b32.xlu0 %v869, 112
        %v952 = vpop.permute.xlu0 %951
        %955 = vrot.lane.b32.xlu0 %v919, 16
        %v956 = vpop.permute.xlu0 %955
        %959 = vrot.lane.b32.xlu0 %v905, 32
        %v960 = vpop.permute.xlu0 %959
        %963 = vrot.lane.b32.xlu0 %v921, 48
        %v964 = vpop.permute.xlu0 %963
        %967 = vrot.lane.b32.xlu0 %v913, 64
        %v968 = vpop.permute.xlu0 %967
        %971 = vrot.lane.b32.xlu0 %v923, 80
        %v972 = vpop.permute.xlu0 %971
        %975 = vrot.lane.b32.xlu0 %v917, 96
        %v976 = vpop.permute.xlu0 %975
        %979 = vrot.lane.b32.xlu0 %v925, 112
        %v980 = vpop.permute.xlu0 %979
        %v982 = vsel %vm340, %v845, %v928
        %v983 = vsel %vm342, %v982, %v932
        %v984 = vsel %vm344, %v983, %v936
        %v985 = vsel %vm346, %v984, %v940
        %v986 = vsel %vm348, %v985, %v944
        %v987 = vsel %vm350, %v986, %v948
        %v988 = vsel %vm352, %v987, %v952
        %v989 = vsel %vm340, %v901, %v956
        %v990 = vsel %vm342, %v989, %v960
        %v991 = vsel %vm344, %v990, %v964
        %v992 = vsel %vm346, %v991, %v968
        %v993 = vsel %vm348, %v992, %v972
        %v994 = vsel %vm350, %v993, %v976
        %v995 = vsel %vm352, %v994, %v980
        %996 = vrot.lane.b32.xlu0 %v788, 127
        %v997 = vpop.permute.xlu0 %996
        %998 = vrot.lane.b32.xlu0 %v790, 127
        %v999 = vpop.permute.xlu0 %998
        %1000 = vrot.lane.b32.xlu0 %v793, 127
        %v1001 = vpop.permute.xlu0 %1000
        %1002 = vrot.lane.b32.xlu0 %v795, 127
        %v1003 = vpop.permute.xlu0 %1002
        %1004 = vrot.lane.b32.xlu0 %v798, 127
        %v1005 = vpop.permute.xlu0 %1004
        %1006 = vrot.lane.b32.xlu0 %v800, 127
        %v1007 = vpop.permute.xlu0 %1006
        %1008 = vrot.lane.b32.xlu0 %v803, 127
        %v1009 = vpop.permute.xlu0 %1008
        %1010 = vrot.lane.b32.xlu0 %v805, 127
        %v1011 = vpop.permute.xlu0 %1010
        %v1020 = vrot.slane %v1005, 4
        %v1021 = vsel %vm172, %v1020, %v997
        %v1022 = vrot.slane %v997, 4
        %v1023 = vsel %vm172, %v1005, %v1022
        %v1025 = vunpack.c.l.s4 1983009808
        %v1026 = vunpack.c.0.s8 %v1025
        %v1027 = vperm.slane %v1021, %v1026
        %v1029 = vunpack.c.l.s4 1983009808
        %v1030 = vunpack.c.0.s8 %v1029
        %v1031 = vperm.slane %v1023, %v1030
        %v1032 = vrot.slane %v1009, 4
        %v1033 = vsel %vm172, %v1032, %v1001
        %v1034 = vrot.slane %v1001, 4
        %v1035 = vsel %vm172, %v1009, %v1034
        %v1037 = vunpack.c.l.s4 1983009808
        %v1038 = vunpack.c.0.s8 %v1037
        %v1039 = vperm.slane %v1033, %v1038
        %v1041 = vunpack.c.l.s4 1983009808
        %v1042 = vunpack.c.0.s8 %v1041
        %v1043 = vperm.slane %v1035, %v1042
        %v1044 = vrot.slane %v1039, 4
        %v1045 = vsel %vm172, %v1044, %v1027
        %v1046 = vrot.slane %v1027, 4
        %v1047 = vsel %vm172, %v1039, %v1046
        %v1049 = vunpack.c.l.s4 1934713408
        %v1050 = vunpack.c.0.s8 %v1049
        %v1051 = vperm.slane %v1045, %v1050
        %v1053 = vunpack.c.l.s4 1934713408
        %v1054 = vunpack.c.0.s8 %v1053
        %v1055 = vperm.slane %v1047, %v1054
        %v1056 = vrot.slane %v1043, 4
        %v1057 = vsel %vm172, %v1056, %v1031
        %v1058 = vrot.slane %v1031, 4
        %v1059 = vsel %vm172, %v1043, %v1058
        %v1061 = vunpack.c.l.s4 1934713408
        %v1062 = vunpack.c.0.s8 %v1061
        %v1063 = vperm.slane %v1057, %v1062
        %v1065 = vunpack.c.l.s4 1934713408
        %v1066 = vunpack.c.0.s8 %v1065
        %v1067 = vperm.slane %v1059, %v1066
        %v1068 = vrot.slane %v1051, 4
        %v1069 = vsel %vm172, 0.0, %v1068
        %v1070 = vrot.slane %v1055, 4
        %v1071 = vsel %vm172, 0.0, %v1070
        %v1072 = vrot.slane %v1063, 4
        %v1073 = vsel %vm172, 0.0, %v1072
        %v1074 = vrot.slane %v1067, 4
        %v1075 = vsel %vm172, 0.0, %v1074
        %v1076 = vrot.slane %v1007, 4
        %v1077 = vsel %vm172, %v1076, %v999
        %v1078 = vrot.slane %v999, 4
        %v1079 = vsel %vm172, %v1007, %v1078
        %v1081 = vunpack.c.l.s4 1983009808
        %v1082 = vunpack.c.0.s8 %v1081
        %v1083 = vperm.slane %v1077, %v1082
        %v1085 = vunpack.c.l.s4 1983009808
        %v1086 = vunpack.c.0.s8 %v1085
        %v1087 = vperm.slane %v1079, %v1086
        %v1088 = vrot.slane %v1011, 4
        %v1089 = vsel %vm172, %v1088, %v1003
        %v1090 = vrot.slane %v1003, 4
        %v1091 = vsel %vm172, %v1011, %v1090
        %v1093 = vunpack.c.l.s4 1983009808
        %v1094 = vunpack.c.0.s8 %v1093
        %v1095 = vperm.slane %v1089, %v1094
        %v1097 = vunpack.c.l.s4 1983009808
        %v1098 = vunpack.c.0.s8 %v1097
        %v1099 = vperm.slane %v1091, %v1098
        %v1100 = vrot.slane %v1095, 4
        %v1101 = vsel %vm172, %v1100, %v1083
        %v1102 = vrot.slane %v1083, 4
        %v1103 = vsel %vm172, %v1095, %v1102
        %v1105 = vunpack.c.l.s4 1934713408
        %v1106 = vunpack.c.0.s8 %v1105
        %v1107 = vperm.slane %v1101, %v1106
        %v1109 = vunpack.c.l.s4 1934713408
        %v1110 = vunpack.c.0.s8 %v1109
        %v1111 = vperm.slane %v1103, %v1110
        %v1112 = vrot.slane %v1099, 4
        %v1113 = vsel %vm172, %v1112, %v1087
        %v1114 = vrot.slane %v1087, 4
        %v1115 = vsel %vm172, %v1099, %v1114
        %v1117 = vunpack.c.l.s4 1934713408
        %v1118 = vunpack.c.0.s8 %v1117
        %v1119 = vperm.slane %v1113, %v1118
        %v1121 = vunpack.c.l.s4 1934713408
        %v1122 = vunpack.c.0.s8 %v1121
        %v1123 = vperm.slane %v1115, %v1122
        %v1124 = vrot.slane %v1107, 4
        %v1125 = vsel %vm172, 0.0, %v1124
        %v1126 = vrot.slane %v1111, 4
        %v1127 = vsel %vm172, 0.0, %v1126
        %v1128 = vrot.slane %v1119, 4
        %v1129 = vsel %vm172, 0.0, %v1128
        %v1130 = vrot.slane %v1123, 4
        %v1131 = vsel %vm172, 0.0, %v1130
        %1133 = vrot.lane.b32.xlu0 %v1069, 16
        %v1134 = vpop.permute.xlu0 %1133
        %1137 = vrot.lane.b32.xlu0 %v1055, 32
        %v1138 = vpop.permute.xlu0 %1137
        %1141 = vrot.lane.b32.xlu0 %v1071, 48
        %v1142 = vpop.permute.xlu0 %1141
        %1145 = vrot.lane.b32.xlu0 %v1063, 64
        %v1146 = vpop.permute.xlu0 %1145
        %1149 = vrot.lane.b32.xlu0 %v1073, 80
        %v1150 = vpop.permute.xlu0 %1149
        %1153 = vrot.lane.b32.xlu0 %v1067, 96
        %v1154 = vpop.permute.xlu0 %1153
        %1157 = vrot.lane.b32.xlu0 %v1075, 112
        %v1158 = vpop.permute.xlu0 %1157
        %1161 = vrot.lane.b32.xlu0 %v1125, 16
        %v1162 = vpop.permute.xlu0 %1161
        %1165 = vrot.lane.b32.xlu0 %v1111, 32
        %v1166 = vpop.permute.xlu0 %1165
        %1169 = vrot.lane.b32.xlu0 %v1127, 48
        %v1170 = vpop.permute.xlu0 %1169
        %1173 = vrot.lane.b32.xlu0 %v1119, 64
        %v1174 = vpop.permute.xlu0 %1173
        %1177 = vrot.lane.b32.xlu0 %v1129, 80
        %v1178 = vpop.permute.xlu0 %1177
        %1181 = vrot.lane.b32.xlu0 %v1123, 96
        %v1182 = vpop.permute.xlu0 %1181
        %1185 = vrot.lane.b32.xlu0 %v1131, 112
        %v1186 = vpop.permute.xlu0 %1185
        %v1188 = vsel %vm340, %v1051, %v1134
        %v1189 = vsel %vm342, %v1188, %v1138
        %v1190 = vsel %vm344, %v1189, %v1142
        %v1191 = vsel %vm346, %v1190, %v1146
        %v1192 = vsel %vm348, %v1191, %v1150
        %v1193 = vsel %vm350, %v1192, %v1154
        %v1194 = vsel %vm352, %v1193, %v1158
        %v1195 = vsel %vm340, %v1107, %v1162
        %v1196 = vsel %vm342, %v1195, %v1166
        %v1197 = vsel %vm344, %v1196, %v1170
        %v1198 = vsel %vm346, %v1197, %v1174
        %v1199 = vsel %vm348, %v1198, %v1178
        %v1200 = vsel %vm350, %v1199, %v1182
        %v1201 = vsel %vm352, %v1200, %v1186
        %1202 = vrot.lane.b32.xlu0 %v788, 126
        %v1203 = vpop.permute.xlu0 %1202
        %1204 = vrot.lane.b32.xlu0 %v790, 126
        %v1205 = vpop.permute.xlu0 %1204
        %1206 = vrot.lane.b32.xlu0 %v793, 126
        %v1207 = vpop.permute.xlu0 %1206
        %1208 = vrot.lane.b32.xlu0 %v795, 126
        %v1209 = vpop.permute.xlu0 %1208
        %1210 = vrot.lane.b32.xlu0 %v798, 126
        %v1211 = vpop.permute.xlu0 %1210
        %1212 = vrot.lane.b32.xlu0 %v800, 126
        %v1213 = vpop.permute.xlu0 %1212
        %1214 = vrot.lane.b32.xlu0 %v803, 126
        %v1215 = vpop.permute.xlu0 %1214
        %1216 = vrot.lane.b32.xlu0 %v805, 126
        %v1217 = vpop.permute.xlu0 %1216
        %v1226 = vrot.slane %v1211, 4
        %v1227 = vsel %vm172, %v1226, %v1203
        %v1228 = vrot.slane %v1203, 4
        %v1229 = vsel %vm172, %v1211, %v1228
        %v1231 = vunpack.c.l.s4 1983009808
        %v1232 = vunpack.c.0.s8 %v1231
        %v1233 = vperm.slane %v1227, %v1232
        %v1235 = vunpack.c.l.s4 1983009808
        %v1236 = vunpack.c.0.s8 %v1235
        %v1237 = vperm.slane %v1229, %v1236
        %v1238 = vrot.slane %v1215, 4
        %v1239 = vsel %vm172, %v1238, %v1207
        %v1240 = vrot.slane %v1207, 4
        %v1241 = vsel %vm172, %v1215, %v1240
        %v1243 = vunpack.c.l.s4 1983009808
        %v1244 = vunpack.c.0.s8 %v1243
        %v1245 = vperm.slane %v1239, %v1244
        %v1247 = vunpack.c.l.s4 1983009808
        %v1248 = vunpack.c.0.s8 %v1247
        %v1249 = vperm.slane %v1241, %v1248
        %v1250 = vrot.slane %v1245, 4
        %v1251 = vsel %vm172, %v1250, %v1233
        %v1252 = vrot.slane %v1233, 4
        %v1253 = vsel %vm172, %v1245, %v1252
        %v1255 = vunpack.c.l.s4 1934713408
        %v1256 = vunpack.c.0.s8 %v1255
        %v1257 = vperm.slane %v1251, %v1256
        %v1259 = vunpack.c.l.s4 1934713408
        %v1260 = vunpack.c.0.s8 %v1259
        %v1261 = vperm.slane %v1253, %v1260
        %v1262 = vrot.slane %v1249, 4
        %v1263 = vsel %vm172, %v1262, %v1237
        %v1264 = vrot.slane %v1237, 4
        %v1265 = vsel %vm172, %v1249, %v1264
        %v1267 = vunpack.c.l.s4 1934713408
        %v1268 = vunpack.c.0.s8 %v1267
        %v1269 = vperm.slane %v1263, %v1268
        %v1271 = vunpack.c.l.s4 1934713408
        %v1272 = vunpack.c.0.s8 %v1271
        %v1273 = vperm.slane %v1265, %v1272
        %v1274 = vrot.slane %v1257, 4
        %v1275 = vsel %vm172, 0.0, %v1274
        %v1276 = vrot.slane %v1261, 4
        %v1277 = vsel %vm172, 0.0, %v1276
        %v1278 = vrot.slane %v1269, 4
        %v1279 = vsel %vm172, 0.0, %v1278
        %v1280 = vrot.slane %v1273, 4
        %v1281 = vsel %vm172, 0.0, %v1280
        %v1282 = vrot.slane %v1213, 4
        %v1283 = vsel %vm172, %v1282, %v1205
        %v1284 = vrot.slane %v1205, 4
        %v1285 = vsel %vm172, %v1213, %v1284
        %v1287 = vunpack.c.l.s4 1983009808
        %v1288 = vunpack.c.0.s8 %v1287
        %v1289 = vperm.slane %v1283, %v1288
        %v1291 = vunpack.c.l.s4 1983009808
        %v1292 = vunpack.c.0.s8 %v1291
        %v1293 = vperm.slane %v1285, %v1292
        %v1294 = vrot.slane %v1217, 4
        %v1295 = vsel %vm172, %v1294, %v1209
        %v1296 = vrot.slane %v1209, 4
        %v1297 = vsel %vm172, %v1217, %v1296
        %v1299 = vunpack.c.l.s4 1983009808
        %v1300 = vunpack.c.0.s8 %v1299
        %v1301 = vperm.slane %v1295, %v1300
        %v1303 = vunpack.c.l.s4 1983009808
        %v1304 = vunpack.c.0.s8 %v1303
        %v1305 = vperm.slane %v1297, %v1304
        %v1306 = vrot.slane %v1301, 4
        %v1307 = vsel %vm172, %v1306, %v1289
        %v1308 = vrot.slane %v1289, 4
        %v1309 = vsel %vm172, %v1301, %v1308
        %v1311 = vunpack.c.l.s4 1934713408
        %v1312 = vunpack.c.0.s8 %v1311
        %v1313 = vperm.slane %v1307, %v1312
        %v1315 = vunpack.c.l.s4 1934713408
        %v1316 = vunpack.c.0.s8 %v1315
        %v1317 = vperm.slane %v1309, %v1316
        %v1318 = vrot.slane %v1305, 4
        %v1319 = vsel %vm172, %v1318, %v1293
        %v1320 = vrot.slane %v1293, 4
        %v1321 = vsel %vm172, %v1305, %v1320
        %v1323 = vunpack.c.l.s4 1934713408
        %v1324 = vunpack.c.0.s8 %v1323
        %v1325 = vperm.slane %v1319, %v1324
        %v1327 = vunpack.c.l.s4 1934713408
        %v1328 = vunpack.c.0.s8 %v1327
        %v1329 = vperm.slane %v1321, %v1328
        %v1330 = vrot.slane %v1313, 4
        %v1331 = vsel %vm172, 0.0, %v1330
        %v1332 = vrot.slane %v1317, 4
        %v1333 = vsel %vm172, 0.0, %v1332
        %v1334 = vrot.slane %v1325, 4
        %v1335 = vsel %vm172, 0.0, %v1334
        %v1336 = vrot.slane %v1329, 4
        %v1337 = vsel %vm172, 0.0, %v1336
        %1339 = vrot.lane.b32.xlu0 %v1275, 16
        %v1340 = vpop.permute.xlu0 %1339
        %1343 = vrot.lane.b32.xlu0 %v1261, 32
        %v1344 = vpop.permute.xlu0 %1343
        %1347 = vrot.lane.b32.xlu0 %v1277, 48
        %v1348 = vpop.permute.xlu0 %1347
        %1351 = vrot.lane.b32.xlu0 %v1269, 64
        %v1352 = vpop.permute.xlu0 %1351
        %1355 = vrot.lane.b32.xlu0 %v1279, 80
        %v1356 = vpop.permute.xlu0 %1355
        %1359 = vrot.lane.b32.xlu0 %v1273, 96
        %v1360 = vpop.permute.xlu0 %1359
        %1363 = vrot.lane.b32.xlu0 %v1281, 112
        %v1364 = vpop.permute.xlu0 %1363
        %1367 = vrot.lane.b32.xlu0 %v1331, 16
        %v1368 = vpop.permute.xlu0 %1367
        %1371 = vrot.lane.b32.xlu0 %v1317, 32
        %v1372 = vpop.permute.xlu0 %1371
        %1375 = vrot.lane.b32.xlu0 %v1333, 48
        %v1376 = vpop.permute.xlu0 %1375
        %1379 = vrot.lane.b32.xlu0 %v1325, 64
        %v1380 = vpop.permute.xlu0 %1379
        %1383 = vrot.lane.b32.xlu0 %v1335, 80
        %v1384 = vpop.permute.xlu0 %1383
        %1387 = vrot.lane.b32.xlu0 %v1329, 96
        %v1388 = vpop.permute.xlu0 %1387
        %1391 = vrot.lane.b32.xlu0 %v1337, 112
        %v1392 = vpop.permute.xlu0 %1391
        %v1394 = vsel %vm340, %v1257, %v1340
        %v1395 = vsel %vm342, %v1394, %v1344
        %v1396 = vsel %vm344, %v1395, %v1348
        %v1397 = vsel %vm346, %v1396, %v1352
        %v1398 = vsel %vm348, %v1397, %v1356
        %v1399 = vsel %vm350, %v1398, %v1360
        %v1400 = vsel %vm352, %v1399, %v1364
        %v1401 = vsel %vm340, %v1313, %v1368
        %v1402 = vsel %vm342, %v1401, %v1372
        %v1403 = vsel %vm344, %v1402, %v1376
        %v1404 = vsel %vm346, %v1403, %v1380
        %v1405 = vsel %vm348, %v1404, %v1384
        %v1406 = vsel %vm350, %v1405, %v1388
        %v1407 = vsel %vm352, %v1406, %v1392
        %vm1408 = vcmask 1045504
        %v1409 = vrot.slane %v159, 2
        %v1410 = vrot.slane %v160, 2
        %v1411 = vsel %vm1408, %v1409, %v1410
        %v1412 = vrot.slane %v161, 2
        %v1413 = vsel %vm1408, %v1410, %v1412
        %v1414 = vrot.slane %v162, 2
        %v1415 = vrot.slane %v163, 2
        %v1416 = vsel %vm1408, %v1414, %v1415
        %v1417 = vrot.slane %v164, 2
        %v1418 = vsel %vm1408, %v1415, %v1417
        %v1419 = vrot.slane %v165, 2
        %v1420 = vrot.slane %v166, 2
        %v1421 = vsel %vm1408, %v1419, %v1420
        %v1422 = vrot.slane %v167, 2
        %v1423 = vsel %vm1408, %v1420, %v1422
        %v1424 = vrot.slane %v168, 2
        %v1425 = vrot.slane %v169, 2
        %v1426 = vsel %vm1408, %v1424, %v1425
        %v1427 = vrot.slane %v170, 2
        %v1428 = vsel %vm1408, %v1425, %v1427
        %v1437 = vrot.slane %v1421, 4
        %v1438 = vsel %vm172, %v1437, %v1411
        %v1439 = vrot.slane %v1411, 4
        %v1440 = vsel %vm172, %v1421, %v1439
        %v1442 = vunpack.c.l.s4 1983009808
        %v1443 = vunpack.c.0.s8 %v1442
        %v1444 = vperm.slane %v1438, %v1443
        %v1446 = vunpack.c.l.s4 1983009808
        %v1447 = vunpack.c.0.s8 %v1446
        %v1448 = vperm.slane %v1440, %v1447
        %v1449 = vrot.slane %v1426, 4
        %v1450 = vsel %vm172, %v1449, %v1416
        %v1451 = vrot.slane %v1416, 4
        %v1452 = vsel %vm172, %v1426, %v1451
        %v1454 = vunpack.c.l.s4 1983009808
        %v1455 = vunpack.c.0.s8 %v1454
        %v1456 = vperm.slane %v1450, %v1455
        %v1458 = vunpack.c.l.s4 1983009808
        %v1459 = vunpack.c.0.s8 %v1458
        %v1460 = vperm.slane %v1452, %v1459
        %v1461 = vrot.slane %v1456, 4
        %v1462 = vsel %vm172, %v1461, %v1444
        %v1463 = vrot.slane %v1444, 4
        %v1464 = vsel %vm172, %v1456, %v1463
        %v1466 = vunpack.c.l.s4 1934713408
        %v1467 = vunpack.c.0.s8 %v1466
        %v1468 = vperm.slane %v1462, %v1467
        %v1470 = vunpack.c.l.s4 1934713408
        %v1471 = vunpack.c.0.s8 %v1470
        %v1472 = vperm.slane %v1464, %v1471
        %v1473 = vrot.slane %v1460, 4
        %v1474 = vsel %vm172, %v1473, %v1448
        %v1475 = vrot.slane %v1448, 4
        %v1476 = vsel %vm172, %v1460, %v1475
        %v1478 = vunpack.c.l.s4 1934713408
        %v1479 = vunpack.c.0.s8 %v1478
        %v1480 = vperm.slane %v1474, %v1479
        %v1482 = vunpack.c.l.s4 1934713408
        %v1483 = vunpack.c.0.s8 %v1482
        %v1484 = vperm.slane %v1476, %v1483
        %v1485 = vrot.slane %v1468, 4
        %v1486 = vsel %vm172, 0.0, %v1485
        %v1487 = vrot.slane %v1472, 4
        %v1488 = vsel %vm172, 0.0, %v1487
        %v1489 = vrot.slane %v1480, 4
        %v1490 = vsel %vm172, 0.0, %v1489
        %v1491 = vrot.slane %v1484, 4
        %v1492 = vsel %vm172, 0.0, %v1491
        %v1493 = vrot.slane %v1423, 4
        %v1494 = vsel %vm172, %v1493, %v1413
        %v1495 = vrot.slane %v1413, 4
        %v1496 = vsel %vm172, %v1423, %v1495
        %v1498 = vunpack.c.l.s4 1983009808
        %v1499 = vunpack.c.0.s8 %v1498
        %v1500 = vperm.slane %v1494, %v1499
        %v1502 = vunpack.c.l.s4 1983009808
        %v1503 = vunpack.c.0.s8 %v1502
        %v1504 = vperm.slane %v1496, %v1503
        %v1505 = vrot.slane %v1428, 4
        %v1506 = vsel %vm172, %v1505, %v1418
        %v1507 = vrot.slane %v1418, 4
        %v1508 = vsel %vm172, %v1428, %v1507
        %v1510 = vunpack.c.l.s4 1983009808
        %v1511 = vunpack.c.0.s8 %v1510
        %v1512 = vperm.slane %v1506, %v1511
        %v1514 = vunpack.c.l.s4 1983009808
        %v1515 = vunpack.c.0.s8 %v1514
        %v1516 = vperm.slane %v1508, %v1515
        %v1517 = vrot.slane %v1512, 4
        %v1518 = vsel %vm172, %v1517, %v1500
        %v1519 = vrot.slane %v1500, 4
        %v1520 = vsel %vm172, %v1512, %v1519
        %v1522 = vunpack.c.l.s4 1934713408
        %v1523 = vunpack.c.0.s8 %v1522
        %v1524 = vperm.slane %v1518, %v1523
        %v1526 = vunpack.c.l.s4 1934713408
        %v1527 = vunpack.c.0.s8 %v1526
        %v1528 = vperm.slane %v1520, %v1527
        %v1529 = vrot.slane %v1516, 4
        %v1530 = vsel %vm172, %v1529, %v1504
        %v1531 = vrot.slane %v1504, 4
        %v1532 = vsel %vm172, %v1516, %v1531
        %v1534 = vunpack.c.l.s4 1934713408
        %v1535 = vunpack.c.0.s8 %v1534
        %v1536 = vperm.slane %v1530, %v1535
        %v1538 = vunpack.c.l.s4 1934713408
        %v1539 = vunpack.c.0.s8 %v1538
        %v1540 = vperm.slane %v1532, %v1539
        %v1541 = vrot.slane %v1524, 4
        %v1542 = vsel %vm172, 0.0, %v1541
        %v1543 = vrot.slane %v1528, 4
        %v1544 = vsel %vm172, 0.0, %v1543
        %v1545 = vrot.slane %v1536, 4
        %v1546 = vsel %vm172, 0.0, %v1545
        %v1547 = vrot.slane %v1540, 4
        %v1548 = vsel %vm172, 0.0, %v1547
        %1550 = vrot.lane.b32.xlu0 %v1486, 16
        %v1551 = vpop.permute.xlu0 %1550
        %1554 = vrot.lane.b32.xlu0 %v1472, 32
        %v1555 = vpop.permute.xlu0 %1554
        %1558 = vrot.lane.b32.xlu0 %v1488, 48
        %v1559 = vpop.permute.xlu0 %1558
        %1562 = vrot.lane.b32.xlu0 %v1480, 64
        %v1563 = vpop.permute.xlu0 %1562
        %1566 = vrot.lane.b32.xlu0 %v1490, 80
        %v1567 = vpop.permute.xlu0 %1566
        %1570 = vrot.lane.b32.xlu0 %v1484, 96
        %v1571 = vpop.permute.xlu0 %1570
        %1574 = vrot.lane.b32.xlu0 %v1492, 112
        %v1575 = vpop.permute.xlu0 %1574
        %1578 = vrot.lane.b32.xlu0 %v1542, 16
        %v1579 = vpop.permute.xlu0 %1578
        %1582 = vrot.lane.b32.xlu0 %v1528, 32
        %v1583 = vpop.permute.xlu0 %1582
        %1586 = vrot.lane.b32.xlu0 %v1544, 48
        %v1587 = vpop.permute.xlu0 %1586
        %1590 = vrot.lane.b32.xlu0 %v1536, 64
        %v1591 = vpop.permute.xlu0 %1590
        %1594 = vrot.lane.b32.xlu0 %v1546, 80
        %v1595 = vpop.permute.xlu0 %1594
        %1598 = vrot.lane.b32.xlu0 %v1540, 96
        %v1599 = vpop.permute.xlu0 %1598
        %1602 = vrot.lane.b32.xlu0 %v1548, 112
        %v1603 = vpop.permute.xlu0 %1602
        %v1605 = vsel %vm340, %v1468, %v1551
        %v1606 = vsel %vm342, %v1605, %v1555
        %v1607 = vsel %vm344, %v1606, %v1559
        %v1608 = vsel %vm346, %v1607, %v1563
        %v1609 = vsel %vm348, %v1608, %v1567
        %v1610 = vsel %vm350, %v1609, %v1571
        %v1611 = vsel %vm352, %v1610, %v1575
        %v1612 = vsel %vm340, %v1524, %v1579
        %v1613 = vsel %vm342, %v1612, %v1583
        %v1614 = vsel %vm344, %v1613, %v1587
        %v1615 = vsel %vm346, %v1614, %v1591
        %v1616 = vsel %vm348, %v1615, %v1595
        %v1617 = vsel %vm350, %v1616, %v1599
        %v1618 = vsel %vm352, %v1617, %v1603
        %1619 = vrot.lane.b32.xlu0 %v1411, 127
        %v1620 = vpop.permute.xlu0 %1619
        %1621 = vrot.lane.b32.xlu0 %v1413, 127
        %v1622 = vpop.permute.xlu0 %1621
        %1623 = vrot.lane.b32.xlu0 %v1416, 127
        %v1624 = vpop.permute.xlu0 %1623
        %1625 = vrot.lane.b32.xlu0 %v1418, 127
        %v1626 = vpop.permute.xlu0 %1625
        %1627 = vrot.lane.b32.xlu0 %v1421, 127
        %v1628 = vpop.permute.xlu0 %1627
        %1629 = vrot.lane.b32.xlu0 %v1423, 127
        %v1630 = vpop.permute.xlu0 %1629
        %1631 = vrot.lane.b32.xlu0 %v1426, 127
        %v1632 = vpop.permute.xlu0 %1631
        %1633 = vrot.lane.b32.xlu0 %v1428, 127
        %v1634 = vpop.permute.xlu0 %1633
        %v1643 = vrot.slane %v1628, 4
        %v1644 = vsel %vm172, %v1643, %v1620
        %v1645 = vrot.slane %v1620, 4
        %v1646 = vsel %vm172, %v1628, %v1645
        %v1648 = vunpack.c.l.s4 1983009808
        %v1649 = vunpack.c.0.s8 %v1648
        %v1650 = vperm.slane %v1644, %v1649
        %v1652 = vunpack.c.l.s4 1983009808
        %v1653 = vunpack.c.0.s8 %v1652
        %v1654 = vperm.slane %v1646, %v1653
        %v1655 = vrot.slane %v1632, 4
        %v1656 = vsel %vm172, %v1655, %v1624
        %v1657 = vrot.slane %v1624, 4
        %v1658 = vsel %vm172, %v1632, %v1657
        %v1660 = vunpack.c.l.s4 1983009808
        %v1661 = vunpack.c.0.s8 %v1660
        %v1662 = vperm.slane %v1656, %v1661
        %v1664 = vunpack.c.l.s4 1983009808
        %v1665 = vunpack.c.0.s8 %v1664
        %v1666 = vperm.slane %v1658, %v1665
        %v1667 = vrot.slane %v1662, 4
        %v1668 = vsel %vm172, %v1667, %v1650
        %v1669 = vrot.slane %v1650, 4
        %v1670 = vsel %vm172, %v1662, %v1669
        %v1672 = vunpack.c.l.s4 1934713408
        %v1673 = vunpack.c.0.s8 %v1672
        %v1674 = vperm.slane %v1668, %v1673
        %v1676 = vunpack.c.l.s4 1934713408
        %v1677 = vunpack.c.0.s8 %v1676
        %v1678 = vperm.slane %v1670, %v1677
        %v1679 = vrot.slane %v1666, 4
        %v1680 = vsel %vm172, %v1679, %v1654
        %v1681 = vrot.slane %v1654, 4
        %v1682 = vsel %vm172, %v1666, %v1681
        %v1684 = vunpack.c.l.s4 1934713408
        %v1685 = vunpack.c.0.s8 %v1684
        %v1686 = vperm.slane %v1680, %v1685
        %v1688 = vunpack.c.l.s4 1934713408
        %v1689 = vunpack.c.0.s8 %v1688
        %v1690 = vperm.slane %v1682, %v1689
        %v1691 = vrot.slane %v1674, 4
        %v1692 = vsel %vm172, 0.0, %v1691
        %v1693 = vrot.slane %v1678, 4
        %v1694 = vsel %vm172, 0.0, %v1693
        %v1695 = vrot.slane %v1686, 4
        %v1696 = vsel %vm172, 0.0, %v1695
        %v1697 = vrot.slane %v1690, 4
        %v1698 = vsel %vm172, 0.0, %v1697
        %v1699 = vrot.slane %v1630, 4
        %v1700 = vsel %vm172, %v1699, %v1622
        %v1701 = vrot.slane %v1622, 4
        %v1702 = vsel %vm172, %v1630, %v1701
        %v1704 = vunpack.c.l.s4 1983009808
        %v1705 = vunpack.c.0.s8 %v1704
        %v1706 = vperm.slane %v1700, %v1705
        %v1708 = vunpack.c.l.s4 1983009808
        %v1709 = vunpack.c.0.s8 %v1708
        %v1710 = vperm.slane %v1702, %v1709
        %v1711 = vrot.slane %v1634, 4
        %v1712 = vsel %vm172, %v1711, %v1626
        %v1713 = vrot.slane %v1626, 4
        %v1714 = vsel %vm172, %v1634, %v1713
        %v1716 = vunpack.c.l.s4 1983009808
        %v1717 = vunpack.c.0.s8 %v1716
        %v1718 = vperm.slane %v1712, %v1717
        %v1720 = vunpack.c.l.s4 1983009808
        %v1721 = vunpack.c.0.s8 %v1720
        %v1722 = vperm.slane %v1714, %v1721
        %v1723 = vrot.slane %v1718, 4
        %v1724 = vsel %vm172, %v1723, %v1706
        %v1725 = vrot.slane %v1706, 4
        %v1726 = vsel %vm172, %v1718, %v1725
        %v1728 = vunpack.c.l.s4 1934713408
        %v1729 = vunpack.c.0.s8 %v1728
        %v1730 = vperm.slane %v1724, %v1729
        %v1732 = vunpack.c.l.s4 1934713408
        %v1733 = vunpack.c.0.s8 %v1732
        %v1734 = vperm.slane %v1726, %v1733
        %v1735 = vrot.slane %v1722, 4
        %v1736 = vsel %vm172, %v1735, %v1710
        %v1737 = vrot.slane %v1710, 4
        %v1738 = vsel %vm172, %v1722, %v1737
        %v1740 = vunpack.c.l.s4 1934713408
        %v1741 = vunpack.c.0.s8 %v1740
        %v1742 = vperm.slane %v1736, %v1741
        %v1744 = vunpack.c.l.s4 1934713408
        %v1745 = vunpack.c.0.s8 %v1744
        %v1746 = vperm.slane %v1738, %v1745
        %v1747 = vrot.slane %v1730, 4
        %v1748 = vsel %vm172, 0.0, %v1747
        %v1749 = vrot.slane %v1734, 4
        %v1750 = vsel %vm172, 0.0, %v1749
        %v1751 = vrot.slane %v1742, 4
        %v1752 = vsel %vm172, 0.0, %v1751
        %v1753 = vrot.slane %v1746, 4
        %v1754 = vsel %vm172, 0.0, %v1753
        %1756 = vrot.lane.b32.xlu0 %v1692, 16
        %v1757 = vpop.permute.xlu0 %1756
        %1760 = vrot.lane.b32.xlu0 %v1678, 32
        %v1761 = vpop.permute.xlu0 %1760
        %1764 = vrot.lane.b32.xlu0 %v1694, 48
        %v1765 = vpop.permute.xlu0 %1764
        %1768 = vrot.lane.b32.xlu0 %v1686, 64
        %v1769 = vpop.permute.xlu0 %1768
        %1772 = vrot.lane.b32.xlu0 %v1696, 80
        %v1773 = vpop.permute.xlu0 %1772
        %1776 = vrot.lane.b32.xlu0 %v1690, 96
        %v1777 = vpop.permute.xlu0 %1776
        %1780 = vrot.lane.b32.xlu0 %v1698, 112
        %v1781 = vpop.permute.xlu0 %1780
        %1784 = vrot.lane.b32.xlu0 %v1748, 16
        %v1785 = vpop.permute.xlu0 %1784
        %1788 = vrot.lane.b32.xlu0 %v1734, 32
        %v1789 = vpop.permute.xlu0 %1788
        %1792 = vrot.lane.b32.xlu0 %v1750, 48
        %v1793 = vpop.permute.xlu0 %1792
        %1796 = vrot.lane.b32.xlu0 %v1742, 64
        %v1797 = vpop.permute.xlu0 %1796
        %1800 = vrot.lane.b32.xlu0 %v1752, 80
        %v1801 = vpop.permute.xlu0 %1800
        %1804 = vrot.lane.b32.xlu0 %v1746, 96
        %v1805 = vpop.permute.xlu0 %1804
        %1808 = vrot.lane.b32.xlu0 %v1754, 112
        %v1809 = vpop.permute.xlu0 %1808
        %v1811 = vsel %vm340, %v1674, %v1757
        %v1812 = vsel %vm342, %v1811, %v1761
        %v1813 = vsel %vm344, %v1812, %v1765
        %v1814 = vsel %vm346, %v1813, %v1769
        %v1815 = vsel %vm348, %v1814, %v1773
        %v1816 = vsel %vm350, %v1815, %v1777
        %v1817 = vsel %vm352, %v1816, %v1781
        %v1818 = vsel %vm340, %v1730, %v1785
        %v1819 = vsel %vm342, %v1818, %v1789
        %v1820 = vsel %vm344, %v1819, %v1793
        %v1821 = vsel %vm346, %v1820, %v1797
        %v1822 = vsel %vm348, %v1821, %v1801
        %v1823 = vsel %vm350, %v1822, %v1805
        %v1824 = vsel %vm352, %v1823, %v1809
        %1825 = vrot.lane.b32.xlu0 %v1411, 126
        %v1826 = vpop.permute.xlu0 %1825
        %1827 = vrot.lane.b32.xlu0 %v1413, 126
        %v1828 = vpop.permute.xlu0 %1827
        %1829 = vrot.lane.b32.xlu0 %v1416, 126
        %v1830 = vpop.permute.xlu0 %1829
        %1831 = vrot.lane.b32.xlu0 %v1418, 126
        %v1832 = vpop.permute.xlu0 %1831
        %1833 = vrot.lane.b32.xlu0 %v1421, 126
        %v1834 = vpop.permute.xlu0 %1833
        %1835 = vrot.lane.b32.xlu0 %v1423, 126
        %v1836 = vpop.permute.xlu0 %1835
        %1837 = vrot.lane.b32.xlu0 %v1426, 126
        %v1838 = vpop.permute.xlu0 %1837
        %1839 = vrot.lane.b32.xlu0 %v1428, 126
        %v1840 = vpop.permute.xlu0 %1839
        %v1849 = vrot.slane %v1834, 4
        %v1850 = vsel %vm172, %v1849, %v1826
        %v1851 = vrot.slane %v1826, 4
        %v1852 = vsel %vm172, %v1834, %v1851
        %v1854 = vunpack.c.l.s4 1983009808
        %v1855 = vunpack.c.0.s8 %v1854
        %v1856 = vperm.slane %v1850, %v1855
        %v1858 = vunpack.c.l.s4 1983009808
        %v1859 = vunpack.c.0.s8 %v1858
        %v1860 = vperm.slane %v1852, %v1859
        %v1861 = vrot.slane %v1838, 4
        %v1862 = vsel %vm172, %v1861, %v1830
        %v1863 = vrot.slane %v1830, 4
        %v1864 = vsel %vm172, %v1838, %v1863
        %v1866 = vunpack.c.l.s4 1983009808
        %v1867 = vunpack.c.0.s8 %v1866
        %v1868 = vperm.slane %v1862, %v1867
        %v1870 = vunpack.c.l.s4 1983009808
        %v1871 = vunpack.c.0.s8 %v1870
        %v1872 = vperm.slane %v1864, %v1871
        %v1873 = vrot.slane %v1868, 4
        %v1874 = vsel %vm172, %v1873, %v1856
        %v1875 = vrot.slane %v1856, 4
        %v1876 = vsel %vm172, %v1868, %v1875
        %v1878 = vunpack.c.l.s4 1934713408
        %v1879 = vunpack.c.0.s8 %v1878
        %v1880 = vperm.slane %v1874, %v1879
        %v1882 = vunpack.c.l.s4 1934713408
        %v1883 = vunpack.c.0.s8 %v1882
        %v1884 = vperm.slane %v1876, %v1883
        %v1885 = vrot.slane %v1872, 4
        %v1886 = vsel %vm172, %v1885, %v1860
        %v1887 = vrot.slane %v1860, 4
        %v1888 = vsel %vm172, %v1872, %v1887
        %v1890 = vunpack.c.l.s4 1934713408
        %v1891 = vunpack.c.0.s8 %v1890
        %v1892 = vperm.slane %v1886, %v1891
        %v1894 = vunpack.c.l.s4 1934713408
        %v1895 = vunpack.c.0.s8 %v1894
        %v1896 = vperm.slane %v1888, %v1895
        %v1897 = vrot.slane %v1880, 4
        %v1898 = vsel %vm172, 0.0, %v1897
        %v1899 = vrot.slane %v1884, 4
        %v1900 = vsel %vm172, 0.0, %v1899
        %v1901 = vrot.slane %v1892, 4
        %v1902 = vsel %vm172, 0.0, %v1901
        %v1903 = vrot.slane %v1896, 4
        %v1904 = vsel %vm172, 0.0, %v1903
        %v1905 = vrot.slane %v1836, 4
        %v1906 = vsel %vm172, %v1905, %v1828
        %v1907 = vrot.slane %v1828, 4
        %v1908 = vsel %vm172, %v1836, %v1907
        %v1910 = vunpack.c.l.s4 1983009808
        %v1911 = vunpack.c.0.s8 %v1910
        %v1912 = vperm.slane %v1906, %v1911
        %v1914 = vunpack.c.l.s4 1983009808
        %v1915 = vunpack.c.0.s8 %v1914
        %v1916 = vperm.slane %v1908, %v1915
        %v1917 = vrot.slane %v1840, 4
        %v1918 = vsel %vm172, %v1917, %v1832
        %v1919 = vrot.slane %v1832, 4
        %v1920 = vsel %vm172, %v1840, %v1919
        %v1922 = vunpack.c.l.s4 1983009808
        %v1923 = vunpack.c.0.s8 %v1922
        %v1924 = vperm.slane %v1918, %v1923
        %v1926 = vunpack.c.l.s4 1983009808
        %v1927 = vunpack.c.0.s8 %v1926
        %v1928 = vperm.slane %v1920, %v1927
        %v1929 = vrot.slane %v1924, 4
        %v1930 = vsel %vm172, %v1929, %v1912
        %v1931 = vrot.slane %v1912, 4
        %v1932 = vsel %vm172, %v1924, %v1931
        %v1934 = vunpack.c.l.s4 1934713408
        %v1935 = vunpack.c.0.s8 %v1934
        %v1936 = vperm.slane %v1930, %v1935
        %v1938 = vunpack.c.l.s4 1934713408
        %v1939 = vunpack.c.0.s8 %v1938
        %v1940 = vperm.slane %v1932, %v1939
        %v1941 = vrot.slane %v1928, 4
        %v1942 = vsel %vm172, %v1941, %v1916
        %v1943 = vrot.slane %v1916, 4
        %v1944 = vsel %vm172, %v1928, %v1943
        %v1946 = vunpack.c.l.s4 1934713408
        %v1947 = vunpack.c.0.s8 %v1946
        %v1948 = vperm.slane %v1942, %v1947
        %v1950 = vunpack.c.l.s4 1934713408
        %v1951 = vunpack.c.0.s8 %v1950
        %v1952 = vperm.slane %v1944, %v1951
        %v1953 = vrot.slane %v1936, 4
        %v1954 = vsel %vm172, 0.0, %v1953
        %v1955 = vrot.slane %v1940, 4
        %v1956 = vsel %vm172, 0.0, %v1955
        %v1957 = vrot.slane %v1948, 4
        %v1958 = vsel %vm172, 0.0, %v1957
        %v1959 = vrot.slane %v1952, 4
        %v1960 = vsel %vm172, 0.0, %v1959
        %1962 = vrot.lane.b32.xlu0 %v1898, 16
        %v1963 = vpop.permute.xlu0 %1962
        %1966 = vrot.lane.b32.xlu0 %v1884, 32
        %v1967 = vpop.permute.xlu0 %1966
        %1970 = vrot.lane.b32.xlu0 %v1900, 48
        %v1971 = vpop.permute.xlu0 %1970
        %1974 = vrot.lane.b32.xlu0 %v1892, 64
        %v1975 = vpop.permute.xlu0 %1974
        %1978 = vrot.lane.b32.xlu0 %v1902, 80
        %v1979 = vpop.permute.xlu0 %1978
        %1982 = vrot.lane.b32.xlu0 %v1896, 96
        %v1983 = vpop.permute.xlu0 %1982
        %1986 = vrot.lane.b32.xlu0 %v1904, 112
        %v1987 = vpop.permute.xlu0 %1986
        %1990 = vrot.lane.b32.xlu0 %v1954, 16
        %v1991 = vpop.permute.xlu0 %1990
        %1994 = vrot.lane.b32.xlu0 %v1940, 32
        %v1995 = vpop.permute.xlu0 %1994
        %1998 = vrot.lane.b32.xlu0 %v1956, 48
        %v1999 = vpop.permute.xlu0 %1998
        %2002 = vrot.lane.b32.xlu0 %v1948, 64
        %v2003 = vpop.permute.xlu0 %2002
        %2006 = vrot.lane.b32.xlu0 %v1958, 80
        %v2007 = vpop.permute.xlu0 %2006
        %2010 = vrot.lane.b32.xlu0 %v1952, 96
        %v2011 = vpop.permute.xlu0 %2010
        %2014 = vrot.lane.b32.xlu0 %v1960, 112
        %v2015 = vpop.permute.xlu0 %2014
        %v2017 = vsel %vm340, %v1880, %v1963
        %v2018 = vsel %vm342, %v2017, %v1967
        %v2019 = vsel %vm344, %v2018, %v1971
        %v2020 = vsel %vm346, %v2019, %v1975
        %v2021 = vsel %vm348, %v2020, %v1979
        %v2022 = vsel %vm350, %v2021, %v1983
        %v2023 = vsel %vm352, %v2022, %v1987
        %v2024 = vsel %vm340, %v1936, %v1991
        %v2025 = vsel %vm342, %v2024, %v1995
        %v2026 = vsel %vm344, %v2025, %v1999
        %v2027 = vsel %vm346, %v2026, %v2003
        %v2028 = vsel %vm348, %v2027, %v2007
        %v2029 = vsel %vm350, %v2028, %v2011
        %v2030 = vsel %vm352, %v2029, %v2015
        %v2033 = vrot.slane %v567, 4
        %v2034 = vrot.slane %v574, 4
        %v2039 = vrot.slane %v988, 4
        %v2040 = vrot.slane %v995, 4
        %v2045 = vrot.slane %v1400, 4
        %v2046 = vrot.slane %v1407, 4
        %v2051 = vrot.slane %v1817, 4
        %v2052 = vrot.slane %v1824, 4
        %vm2055 = vcmask 1043456
        %v2056 = vsel %vm2055, %v353, %v2033
        %v2057 = vsel %vm2055, %v360, %v2034
        %v2058 = vsel %vm2055, %v773, %v2039
        %v2059 = vsel %vm2055, %v780, %v2040
        %v2060 = vsel %vm2055, %v1194, %v2045
        %v2061 = vsel %vm2055, %v1201, %v2046
        %v2062 = vsel %vm2055, %v1611, %v2051
        %v2063 = vsel %vm2055, %v1618, %v2052
        %v2064 = vld [vmem:[%s1] sm:$0xff]
        %vm2065 = vcmask 293888
        %v2067 = vsel %vm2065, %v2064, 0
        %v2070 = vsel %vm2055, %v2023, 0
        %v2073 = vsel %vm2055, %v2030, 0
        %2075 = vmatpush.msra.mxu0 0.0
        %2076 = vmatpush.msra.mxu0 0.0
        %2077 = vmatpush.msra.mxu0 0.0
        %2078 = vmatpush.msra.mxu0 0.0
        %2079 = vmatpush.msra.mxu0 0.0
        %2080 = vmatpush.msra.mxu0 0.0
        %2081 = vmatpush.msra.mxu0 0.0
        %2082 = vmatpush.msra.mxu0 0.0
        %2083 = vmatpush.msra.mxu0 0.0
        %2084 = vmatpush.msra.mxu0 0.0
        %2085 = vmatpush.msra.mxu0 0.0
        %2086 = vmatpush.msra.mxu0 %v2070
        %2087 = vmatpush.msra.mxu0 %v2062
        %2088 = vmatpush.msra.mxu0 %v2060
        %2089 = vmatpush.msra.mxu0 %v2058
        %2090 = vmatpush.msra.mxu0 %v2056
        %2091 = vmatmul.f32.gmra.mxu0 %v2067
        %v2092 = vpop.f32.mrf.mxu0
        %v2093 = vadd.f32 0.0, %v2092
        %2094 = vdwg.mxu0
        %2095 = vmatpush.msra.mxu0 0.0
        %2096 = vmatpush.msra.mxu0 0.0
        %2097 = vmatpush.msra.mxu0 0.0
        %2098 = vmatpush.msra.mxu0 0.0
        %2099 = vmatpush.msra.mxu0 0.0
        %2100 = vmatpush.msra.mxu0 0.0
        %2101 = vmatpush.msra.mxu0 0.0
        %2102 = vmatpush.msra.mxu0 0.0
        %2103 = vmatpush.msra.mxu0 0.0
        %2104 = vmatpush.msra.mxu0 0.0
        %2105 = vmatpush.msra.mxu0 0.0
        %2106 = vmatpush.msra.mxu0 %v2073
        %2107 = vmatpush.msra.mxu0 %v2063
        %2108 = vmatpush.msra.mxu0 %v2061
        %2109 = vmatpush.msra.mxu0 %v2059
        %2110 = vmatpush.msra.mxu0 %v2057
        %2111 = vmatmul.f32.gmra.mxu0 %v2067
        %v2112 = vpop.f32.mrf.mxu0
        %v2113 = vadd.f32 0.0, %v2112
        %2114 = vdwg.mxu0
        %2115 = vst [vmem:[%s150] sm:$0xff] %v2093
        %2116 = vst [vmem:[%s150 + $0x8] sm:$0xff] %v2113
        %s2117 = sand.u32 %s85, 1
        %s2118 = scalar_lea.sflag [#allocation3], %s2117
        %s2119 = sand.u32 %s85, 1
        %s2120 = smul.addr %s2119, 16
        %s2121 = scalar_lea.vmem [#allocation2], %s2120
        // Predicated region
        $region29: #{tpu_custom_call.1} parent=27 // pred_check
          %p2122 = pneg %p95
        $region30: #{tpu_custom_call.1} parent=27 // pred_check_branch
          %2124 = sbr.rel (%p2122) target = $region32
        $region31: #{tpu_custom_call.1} parent=27 // pred_region
          %s2125 = smul.u32 2, %s21
          %2127 = vsyncadd %s2118, 0
          %s2128 = smul.addr %s20, 2
          %s2129 = sadd.s32 %s2125, %s2128
          %s2130 = smul.addr %s2129, 8
          %s2131 = scalar_lea.hbm %s2, %s2130
          %s2133 = sshll.u32 %s2121, 4
          %s2134 = int_to_ptr.vmem [resolvable:$true] %s2133
          %s2135 = sshll.u32 %s2131, 4
          %s2136 = int_to_ptr.hbm [resolvable:$true] %s2135
          %2138 = dma.vmem_to_hbm [thread:$0]  %s2134, 256, %s2136, %s2118
        $region32: #{tpu_custom_call.1} parent=27 // pred_fallthru
          _
      $region28: #{tpu_custom_call.1} parent=5 // pred_fallthru
        _
      %p2139 = scmp.le.s32.totalorder 2, %s11
      // Predicated region
      $region33: #{tpu_custom_call.1} parent=5 // pred_check
        %p2140 = pneg %p2139
      $region34: #{tpu_custom_call.1} parent=5 // pred_check_branch
        %2142 = sbr.rel (%p2140) target = $region36
      $region35: #{tpu_custom_call.1} parent=5 // pred_region
        %s2143 = ssub.s32 %s11, 2
        // Predicated region
        $region37: #{tpu_custom_call.1} parent=35 // pred_check
          %p2144 = pneg %p101
        $region38: #{tpu_custom_call.1} parent=35 // pred_check_branch
          %2146 = sbr.rel (%p2144) target = $region40
        $region39: #{tpu_custom_call.1} parent=35 // pred_region
          %s2147 = sand.u32 %s86, 1
          %s2148 = scalar_lea.sflag [#allocation3], %s2147
          %s2149 = sand.u32 %s86, 1
          %s2150 = smul.addr %s2149, 16
          %s2151 = scalar_lea.vmem [#allocation2], %s2150
          %2153 = dma.done %s2148, 256
        $region40: #{tpu_custom_call.1} parent=35 // pred_fallthru
          _
      $region36: #{tpu_custom_call.1} parent=5 // pred_fallthru
        _
    $region6: #{tpu_custom_call.1} parent=1 // loop_footer
      %s15 = sadd.s32 1, %s11
    $region7: #{tpu_custom_call.1} parent=1 // loop_footer_branch
      %10 = sbr.rel target = $region3
    $region8: #{tpu_custom_call.1} parent=1 // loop_exit
      _
    %2154 = vsyncpa [#allocation3], 1
    %s2155 = scalar_lea.sflag [#allocation3], 1
    %2156 = vsyncpa %s2155, 1

</llo_original>
